<compile_context>
chip_gen: v5e
topology: v5e:2x2
jax: 0.10.0
libtpu: 0.0.40
codegen_flags: <defaults>
</compile_context>

<pallas_src>
import functools

import numpy as np
import jax
import jax.numpy as jnp
from jax import lax
from jax.experimental import pallas as pl
from jax.experimental.pallas import tpu as pltpu

# ----------------------- module configuration (defaults) -----------------------
IN_CHANNELS = 4
AUG_CHANNELS = IN_CHANNELS + 3 + 3       # + cluster center + voxel center = 10
FEAT_CHANNELS = 64
VOXEL_SIZE = (0.2, 0.2, 8.0)
PCR = (-51.2, -51.2, -5.0, 51.2, 51.2, 3.0)
BN_EPS = 1e-3
MAX_TILE_NV = 256                         # upper bound on voxels per grid step


def _round_up(x, m):
    return ((x + m - 1) // m) * m


def _choose_tile_nv(nv, max_tile=MAX_TILE_NV):
    """>=2 grid blocks when possible (megacore / 2 TCs), pair-packed rows 8-aligned."""
    half_cover = _round_up(max((nv + 1) // 2, 8), 16)
    return int(max(16, min(max_tile, half_cover)))


# --------------------------------- Pallas kernel --------------------------------
def _dpfn_kernel(pts_ref, meta_ref, w_ref, out_ref, *, tile_nv, win):
    """One voxel block: project points (128-lane fused g|h), vectorized segment
    max / segment mean over the fixed per-voxel window, fused affine+ReLU epilogue,
    pair-packed dense (tile_nv/2, 128) output store."""
    half = tile_nv // 2
    w = w_ref[...]                       # (24, 128) packed, BN/affine-folded weights
    pts = pts_ref[...]                   # (tile_nv, win*8): [x y z r padflag 0 0 0] per slot

    # --- per-point projection into the fused 128-lane feature space -------------
    #   lanes 0-63  : g = max-path features (pad slots -> -1e30 via the flag row)
    #   lanes 64-127: h = cluster-mean-path features (pad slots -> 0)
    def project(i):
        b = i * 8
        p = pts[:, b + 0:b + 1] * w[0:1, :]
        p = p + pts[:, b + 1:b + 2] * w[1:2, :]
        p = p + pts[:, b + 2:b + 3] * w[2:3, :]
        p = p + pts[:, b + 3:b + 4] * w[3:4, :]
        p = p + pts[:, b + 4:b + 5] * w[4:5, :]      # pad flag row: -1e30 | 0
        return p

    acc = project(0)
    gmax = acc                           # running segment max (valid in lanes 0-63)
    hsum = acc                           # running segment sum (valid in lanes 64-127)
    for i in range(1, win):              # fully unrolled, element-wise only
        p = project(i)
        gmax = jnp.maximum(gmax, p)
        hsum = hsum + p

    # --- per-voxel correction: folded BN bias + voxel-center affine (paired layout)
    meta = meta_ref[...]                 # (half, 16): [coorsA(4), cntA, 0*3, coorsB(4), cntB, 0*3]
    corr = w[16:17, :]                   # folded bias, replicated in both lane halves
    for k in range(4):
        corr = corr + meta[:, k:k + 1] * w[8 + k:9 + k, :]          # first-half voxels -> lanes 0-63
        corr = corr + meta[:, 8 + k:9 + k] * w[12 + k:13 + k, :]    # second-half voxels -> lanes 64-127
    inv_a = 1.0 / jnp.maximum(meta[:, 4:5], 1.0)
    inv_b = 1.0 / jnp.maximum(meta[:, 12:13], 1.0)

    # --- combine (one cross-lane roll per half), pair-pack, fuse epilogue, store --
    g_a, g_b = gmax[:half, :], gmax[half:, :]
    h_a, h_b = hsum[:half, :], hsum[half:, :]
    res_a = g_a - pltpu.roll(h_a, shift=64, axis=1) * inv_a         # valid in lanes 0-63
    res_b = pltpu.roll(g_b, shift=64, axis=1) - h_b * inv_b         # valid in lanes 64-127
    lane = lax.broadcasted_iota(jnp.int32, (half, 128), 1)
    out_ref[...] = jnp.maximum(jnp.where(lane < 64, res_a, res_b) + corr, 0.0)


# ------------------------------ host-side bookkeeping ----------------------------
def _sort_points_by_voxel(features_np, coors_np):
    """Sort points by linear voxel id; return sorted segments (sorted-unique voxel order)."""
    canvas_y = int(round((PCR[4] - PCR[1]) / VOXEL_SIZE[1]))
    canvas_x = int(round((PCR[3] - PCR[0]) / VOXEL_SIZE[0]))
    lin = (coors_np[:, 0].astype(np.int64) * canvas_y * canvas_x
           + coors_np[:, 2].astype(np.int64) * canvas_x
           + coors_np[:, 3].astype(np.int64))
    order = np.argsort(lin, kind="stable")
    lin_s = lin[order]
    feats_s = features_np[order]
    coors_s = coors_np[order]
    _, starts, inverse, counts = np.unique(
        lin_s, return_index=True, return_inverse=True, return_counts=True)
    return (feats_s, coors_s, inverse.astype(np.int64), starts.astype(np.int64),
            counts.astype(np.int64), int(starts.shape[0]))


def _fold_params(params):
    """Fold BN (eval) + voxel-center affine + re-associated cluster term into one slab."""
    w = np.asarray(params["w"], np.float32)                        # (10, 64)
    gamma = np.asarray(params["gamma"], np.float32).reshape(1, -1)
    beta = np.asarray(params["beta"], np.float32).reshape(1, -1)
    rm = np.asarray(params["rm"], np.float32).reshape(1, -1)
    rv = np.asarray(params["rv"], np.float32).reshape(1, -1)
    scale = gamma / np.sqrt(rv + BN_EPS)
    wf = w * scale
    bias = (beta - rm * scale)[0]                                  # (64,)
    w1, w2, w3 = wf[0:4], wf[4:7], wf[7:10]
    vx, vy, vz = VOXEL_SIZE
    p_mat = np.zeros((4, 3), np.float32)                           # coors [b,z,y,x] -> center
    p_mat[3, 0] = vx
    p_mat[2, 1] = vy
    p_mat[1, 2] = vz
    off = np.array([vx / 2.0, vy / 2.0, vz / 2.0], np.float32)
    wc = -(p_mat @ w3)                                             # (4, 64) voxel-center term
    bias_c = bias - off @ w3                                       # (64,)

    wpack = np.zeros((24, 128), np.float32)
    wpack[0:3, 0:64] = w1[0:3] + w2 + w3       # g (max) path, xyz rows
    wpack[3, 0:64] = w1[3]                     # g path, reflectance row
    wpack[4, 0:64] = -1e30                     # pad-flag row: neutral element of the max
    wpack[0:3, 64:128] = w2                    # h (cluster mean) path, xyz rows
    wpack[8:12, 0:64] = wc                     # corr weights, first-half voxels of a block
    wpack[12:16, 64:128] = wc                  # corr weights, second-half voxels of a block
    wpack[16, 0:64] = bias_c
    wpack[16, 64:128] = bias_c
    return wpack


def dynamic_pillar_feature_net(features, coors, params, max_tile_nv=MAX_TILE_NV):
    """Forward pass. Returns (voxel_feats (Nv, 64) f32, voxel_coors (Nv, 4) i32)."""
    features_np = np.asarray(features, np.float32)
    coors_np = np.asarray(coors)
    n = features_np.shape[0]

    feats_s, coors_s, seg, starts, counts, nv = _sort_points_by_voxel(features_np, coors_np)
    voxel_coors = jnp.asarray(coors_s[starts], jnp.int32)

    tile_nv = _choose_tile_nv(nv, max_tile_nv)
    half = tile_nv // 2
    num_blk = -(-nv // tile_nv)
    nv_pad = num_blk * tile_nv
    win = max(int(counts.max()), 1)            # fixed per-voxel window (lane-major)

    # --- vectorized host packing: one row of win*8 lanes per voxel -----------------
    slot = np.arange(n, dtype=np.int64) - starts[seg]
    pts_packed = np.zeros((nv_pad, win * 8), np.float32)
    for c in range(IN_CHANNELS):
        pts_packed[seg, slot * 8 + c] = feats_s[:, c]
    padflag = np.ones((nv_pad, win), np.float32)
    padflag[seg, slot] = 0.0
    pts_packed[:, 4::8] = padflag

    coorsf = np.zeros((nv_pad, 4), np.float32)
    coorsf[:nv] = coors_s[starts].astype(np.float32)
    cntf = np.zeros((nv_pad,), np.float32)
    cntf[:nv] = counts.astype(np.float32)
    meta = np.zeros((num_blk, half, 16), np.float32)
    meta[:, :, 0:4] = coorsf.reshape(num_blk, tile_nv, 4)[:, :half]
    meta[:, :, 4] = cntf.reshape(num_blk, tile_nv)[:, :half]
    meta[:, :, 8:12] = coorsf.reshape(num_blk, tile_nv, 4)[:, half:]
    meta[:, :, 12] = cntf.reshape(num_blk, tile_nv)[:, half:]
    meta = meta.reshape(num_blk * half, 16)

    wpack = _fold_params(params)
    kernel = functools.partial(_dpfn_kernel, tile_nv=tile_nv, win=win)

    grid_spec = pltpu.PrefetchScalarGridSpec(
        num_scalar_prefetch=0,
        grid=(num_blk,),
        in_specs=[
            pl.BlockSpec((tile_nv, win * 8), lambda j: (j, 0)),    # per-voxel point windows
            pl.BlockSpec((half, 16), lambda j: (j, 0)),            # paired voxel metadata
            pl.BlockSpec((24, 128), lambda j: (0, 0)),             # packed folded weights
        ],
        out_specs=pl.BlockSpec((half, 128), lambda j: (j, 0)),     # pair-packed dense output
    )

    try:
        vmem_cap = pltpu.get_tpu_info().vmem_capacity_bytes
    except Exception:
        vmem_cap = 64 * 1024 * 1024
    cparams = pltpu.CompilerParams(
        dimension_semantics=("parallel",),                         # blocks shard across cores
        vmem_limit_bytes=int(min(vmem_cap // 2, 64 * 1024 * 1024)),
    )

    packed = pl.pallas_call(
        kernel,
        out_shape=jax.ShapeDtypeStruct((num_blk * half, 2 * FEAT_CHANNELS), jnp.float32),
        grid_spec=grid_spec,
        compiler_params=cparams,
    )(jnp.asarray(pts_packed), jnp.asarray(meta), jnp.asarray(wpack))

    # unpack voxel pairs: row r of block j holds voxels (j*tile_nv + r | j*tile_nv + half + r)
    vfeat = jnp.transpose(
        packed.reshape(num_blk, half, 2, FEAT_CHANNELS), (0, 2, 1, 3)
    ).reshape(nv_pad, FEAT_CHANNELS)[:nv]
    return vfeat, voxel_coors


# ------------------------------ pure-JAX reference ------------------------------
def ref_forward(features, coors, seg, nv, params):
    xyz = features[:, :3]
    seg = seg.reshape(-1)
    n = features.shape[0]
    cnt = jax.ops.segment_sum(jnp.ones((n,), jnp.float32), seg, nv)
    vmean = jax.ops.segment_sum(xyz, seg, nv) / cnt[:, None]
    f_cluster = xyz - vmean[seg]
    vx, vy, vz = VOXEL_SIZE
    cf = coors.astype(jnp.float32)
    centers = jnp.stack([cf[:, 3] * vx + vx / 2,
                         cf[:, 2] * vy + vy / 2,
                         cf[:, 1] * vz + vz / 2], axis=-1)
    f_center = xyz - centers
    x = jnp.concatenate([features, f_cluster, f_center], axis=-1)
    lin = jnp.dot(x, params["w"], precision=lax.Precision.HIGHEST)
    y = (lin - params["rm"]) * lax.rsqrt(params["rv"] + BN_EPS) * params["gamma"] + params["beta"]
    y = jnp.maximum(y, 0.0)
    return jax.ops.segment_max(y, seg, nv)


# ------------------------------------ main ------------------------------------
if __name__ == "__main__":
    key = jax.random.PRNGKey(0)
    k_w, k_g, k_b, k_rm, k_rv, k_xi, k_yi, k_u, k_v, k_z, k_r = jax.random.split(key, 11)

    # deterministic synthetic parameters (BN in eval mode)
    params = {
        "w": 0.1 * jax.random.normal(k_w, (AUG_CHANNELS, FEAT_CHANNELS), jnp.float32),
        "gamma": 1.0 + 0.1 * jax.random.normal(k_g, (1, FEAT_CHANNELS), jnp.float32),
        "beta": 0.05 * jax.random.normal(k_b, (1, FEAT_CHANNELS), jnp.float32),
        "rm": 0.1 * jax.random.normal(k_rm, (1, FEAT_CHANNELS), jnp.float32),
        "rv": jax.random.uniform(k_rv, (1, FEAT_CHANNELS), jnp.float32, 0.5, 1.5),
    }

    # small deterministic point cloud: N=256 points, batch=2, confined to an 8x8 pillar patch
    N = 256
    x_idx = jax.random.randint(k_xi, (N,), 0, 8)
    y_idx = jax.random.randint(k_yi, (N,), 0, 8)
    u = jax.random.uniform(k_u, (N,), jnp.float32)
    v = jax.random.uniform(k_v, (N,), jnp.float32)
    px = PCR[0] + (x_idx.astype(jnp.float32) + u) * VOXEL_SIZE[0]
    py = PCR[1] + (y_idx.astype(jnp.float32) + v) * VOXEL_SIZE[1]
    pz = jax.random.uniform(k_z, (N,), jnp.float32, PCR[2], PCR[5] - 1e-3)
    pr = jax.random.uniform(k_r, (N,), jnp.float32)
    features = jnp.stack([px, py, pz, pr], axis=-1)                     # (N, 4)

    z_idx = jnp.floor((pz - PCR[2]) / VOXEL_SIZE[2]).astype(jnp.int32)  # == 0 for pillars
    batch = jnp.concatenate([jnp.zeros((N // 2,), jnp.int32),
                             jnp.ones((N - N // 2,), jnp.int32)])
    coors = jnp.stack([batch, z_idx, y_idx.astype(jnp.int32),
                       x_idx.astype(jnp.int32)], axis=-1)               # (N, 4) [b, z, y, x]

    voxel_feats, voxel_coors = dynamic_pillar_feature_net(features, coors, params)
    voxel_feats = jax.block_until_ready(voxel_feats)

    # correctness check against a pure-JAX reference (same sorted-unique voxel order)
    feats_s, coors_s, seg, _, _, nv = _sort_points_by_voxel(
        np.asarray(features, np.float32), np.asarray(coors))
    ref = ref_forward(jnp.asarray(feats_s), jnp.asarray(coors_s), jnp.asarray(seg), nv, params)
    np.testing.assert_allclose(np.asarray(voxel_feats), np.asarray(ref),
                               rtol=1e-3, atol=1e-3)

    print("KERNEL_OK")
</pallas_src>

<mosaic_0001>
module attributes {stable_mosaic.version = 11 : i64} {
  func.func @_dpfn_kernel(%arg0: i32, %arg1: memref<64x64xf32, #tpu.memory_space<vmem>>, %arg2: memref<32x16xf32, #tpu.memory_space<vmem>>, %arg3: memref<24x128xf32, #tpu.memory_space<vmem>>, %arg4: memref<32x128xf32, #tpu.memory_space<vmem>>) attributes {dimension_semantics = [#tpu.dimension_semantics<parallel>], iteration_bounds = array<i64: 2>, scalar_prefetch = 0 : i64, scratch_operands = 0 : i64, tpu.core_type = #tpu.core_type<tc>, window_params = [{transform_indices = @transform_0, window_bounds = array<i64: 64, 64>}, {transform_indices = @transform_1, window_bounds = array<i64: 32, 16>}, {pipeline_mode = #tpu.pipeline_mode<synchronous>, transform_indices = @transform_2, window_bounds = array<i64: 24, 128>}, {transform_indices = @transform_3, window_bounds = array<i64: 32, 128>}]} {
    %c0 = arith.constant 0 : index
    %c0_0 = arith.constant 0 : index
    %0 = vector.load %arg3[%c0, %c0_0] : memref<24x128xf32, #tpu.memory_space<vmem>>, vector<24x128xf32>
    %c0_1 = arith.constant 0 : index
    %c0_2 = arith.constant 0 : index
    %1 = vector.load %arg1[%c0_1, %c0_2] : memref<64x64xf32, #tpu.memory_space<vmem>>, vector<64x64xf32>
    %2 = vector.extract_strided_slice %1 {offsets = [0, 0], sizes = [64, 1], strides = [1, 1]} : vector<64x64xf32> to vector<64x1xf32>
    %3 = vector.extract_strided_slice %0 {offsets = [0, 0], sizes = [1, 128], strides = [1, 1]} : vector<24x128xf32> to vector<1x128xf32>
    %4 = vector.broadcast %2 : vector<64x1xf32> to vector<64x128xf32>
    %5 = vector.broadcast %3 : vector<1x128xf32> to vector<64x128xf32>
    %6 = arith.mulf %4, %5 : vector<64x128xf32>
    %7 = vector.extract_strided_slice %1 {offsets = [0, 1], sizes = [64, 1], strides = [1, 1]} : vector<64x64xf32> to vector<64x1xf32>
    %8 = vector.extract_strided_slice %0 {offsets = [1, 0], sizes = [1, 128], strides = [1, 1]} : vector<24x128xf32> to vector<1x128xf32>
    %9 = vector.broadcast %7 : vector<64x1xf32> to vector<64x128xf32>
    %10 = vector.broadcast %8 : vector<1x128xf32> to vector<64x128xf32>
    %11 = arith.mulf %9, %10 : vector<64x128xf32>
    %12 = arith.addf %6, %11 : vector<64x128xf32>
    %13 = vector.extract_strided_slice %1 {offsets = [0, 2], sizes = [64, 1], strides = [1, 1]} : vector<64x64xf32> to vector<64x1xf32>
    %14 = vector.extract_strided_slice %0 {offsets = [2, 0], sizes = [1, 128], strides = [1, 1]} : vector<24x128xf32> to vector<1x128xf32>
    %15 = vector.broadcast %13 : vector<64x1xf32> to vector<64x128xf32>
    %16 = vector.broadcast %14 : vector<1x128xf32> to vector<64x128xf32>
    %17 = arith.mulf %15, %16 : vector<64x128xf32>
    %18 = arith.addf %12, %17 : vector<64x128xf32>
    %19 = vector.extract_strided_slice %1 {offsets = [0, 3], sizes = [64, 1], strides = [1, 1]} : vector<64x64xf32> to vector<64x1xf32>
    %20 = vector.extract_strided_slice %0 {offsets = [3, 0], sizes = [1, 128], strides = [1, 1]} : vector<24x128xf32> to vector<1x128xf32>
    %21 = vector.broadcast %19 : vector<64x1xf32> to vector<64x128xf32>
    %22 = vector.broadcast %20 : vector<1x128xf32> to vector<64x128xf32>
    %23 = arith.mulf %21, %22 : vector<64x128xf32>
    %24 = arith.addf %18, %23 : vector<64x128xf32>
    %25 = vector.extract_strided_slice %1 {offsets = [0, 4], sizes = [64, 1], strides = [1, 1]} : vector<64x64xf32> to vector<64x1xf32>
    %26 = vector.extract_strided_slice %0 {offsets = [4, 0], sizes = [1, 128], strides = [1, 1]} : vector<24x128xf32> to vector<1x128xf32>
    %27 = vector.broadcast %25 : vector<64x1xf32> to vector<64x128xf32>
    %28 = vector.broadcast %26 : vector<1x128xf32> to vector<64x128xf32>
    %29 = arith.mulf %27, %28 : vector<64x128xf32>
    %30 = arith.addf %24, %29 : vector<64x128xf32>
    %31 = vector.extract_strided_slice %1 {offsets = [0, 8], sizes = [64, 1], strides = [1, 1]} : vector<64x64xf32> to vector<64x1xf32>
    %32 = vector.extract_strided_slice %0 {offsets = [0, 0], sizes = [1, 128], strides = [1, 1]} : vector<24x128xf32> to vector<1x128xf32>
    %33 = vector.broadcast %31 : vector<64x1xf32> to vector<64x128xf32>
    %34 = vector.broadcast %32 : vector<1x128xf32> to vector<64x128xf32>
    %35 = arith.mulf %33, %34 : vector<64x128xf32>
    %36 = vector.extract_strided_slice %1 {offsets = [0, 9], sizes = [64, 1], strides = [1, 1]} : vector<64x64xf32> to vector<64x1xf32>
    %37 = vector.extract_strided_slice %0 {offsets = [1, 0], sizes = [1, 128], strides = [1, 1]} : vector<24x128xf32> to vector<1x128xf32>
    %38 = vector.broadcast %36 : vector<64x1xf32> to vector<64x128xf32>
    %39 = vector.broadcast %37 : vector<1x128xf32> to vector<64x128xf32>
    %40 = arith.mulf %38, %39 : vector<64x128xf32>
    %41 = arith.addf %35, %40 : vector<64x128xf32>
    %42 = vector.extract_strided_slice %1 {offsets = [0, 10], sizes = [64, 1], strides = [1, 1]} : vector<64x64xf32> to vector<64x1xf32>
    %43 = vector.extract_strided_slice %0 {offsets = [2, 0], sizes = [1, 128], strides = [1, 1]} : vector<24x128xf32> to vector<1x128xf32>
    %44 = vector.broadcast %42 : vector<64x1xf32> to vector<64x128xf32>
    %45 = vector.broadcast %43 : vector<1x128xf32> to vector<64x128xf32>
    %46 = arith.mulf %44, %45 : vector<64x128xf32>
    %47 = arith.addf %41, %46 : vector<64x128xf32>
    %48 = vector.extract_strided_slice %1 {offsets = [0, 11], sizes = [64, 1], strides = [1, 1]} : vector<64x64xf32> to vector<64x1xf32>
    %49 = vector.extract_strided_slice %0 {offsets = [3, 0], sizes = [1, 128], strides = [1, 1]} : vector<24x128xf32> to vector<1x128xf32>
    %50 = vector.broadcast %48 : vector<64x1xf32> to vector<64x128xf32>
    %51 = vector.broadcast %49 : vector<1x128xf32> to vector<64x128xf32>
    %52 = arith.mulf %50, %51 : vector<64x128xf32>
    %53 = arith.addf %47, %52 : vector<64x128xf32>
    %54 = vector.extract_strided_slice %1 {offsets = [0, 12], sizes = [64, 1], strides = [1, 1]} : vector<64x64xf32> to vector<64x1xf32>
    %55 = vector.extract_strided_slice %0 {offsets = [4, 0], sizes = [1, 128], strides = [1, 1]} : vector<24x128xf32> to vector<1x128xf32>
    %56 = vector.broadcast %54 : vector<64x1xf32> to vector<64x128xf32>
    %57 = vector.broadcast %55 : vector<1x128xf32> to vector<64x128xf32>
    %58 = arith.mulf %56, %57 : vector<64x128xf32>
    %59 = arith.addf %53, %58 : vector<64x128xf32>
    %60 = arith.maximumf %30, %59 : vector<64x128xf32>
    %61 = arith.addf %30, %59 : vector<64x128xf32>
    %62 = vector.extract_strided_slice %1 {offsets = [0, 16], sizes = [64, 1], strides = [1, 1]} : vector<64x64xf32> to vector<64x1xf32>
    %63 = vector.extract_strided_slice %0 {offsets = [0, 0], sizes = [1, 128], strides = [1, 1]} : vector<24x128xf32> to vector<1x128xf32>
    %64 = vector.broadcast %62 : vector<64x1xf32> to vector<64x128xf32>
    %65 = vector.broadcast %63 : vector<1x128xf32> to vector<64x128xf32>
    %66 = arith.mulf %64, %65 : vector<64x128xf32>
    %67 = vector.extract_strided_slice %1 {offsets = [0, 17], sizes = [64, 1], strides = [1, 1]} : vector<64x64xf32> to vector<64x1xf32>
    %68 = vector.extract_strided_slice %0 {offsets = [1, 0], sizes = [1, 128], strides = [1, 1]} : vector<24x128xf32> to vector<1x128xf32>
    %69 = vector.broadcast %67 : vector<64x1xf32> to vector<64x128xf32>
    %70 = vector.broadcast %68 : vector<1x128xf32> to vector<64x128xf32>
    %71 = arith.mulf %69, %70 : vector<64x128xf32>
    %72 = arith.addf %66, %71 : vector<64x128xf32>
    %73 = vector.extract_strided_slice %1 {offsets = [0, 18], sizes = [64, 1], strides = [1, 1]} : vector<64x64xf32> to vector<64x1xf32>
    %74 = vector.extract_strided_slice %0 {offsets = [2, 0], sizes = [1, 128], strides = [1, 1]} : vector<24x128xf32> to vector<1x128xf32>
    %75 = vector.broadcast %73 : vector<64x1xf32> to vector<64x128xf32>
    %76 = vector.broadcast %74 : vector<1x128xf32> to vector<64x128xf32>
    %77 = arith.mulf %75, %76 : vector<64x128xf32>
    %78 = arith.addf %72, %77 : vector<64x128xf32>
    %79 = vector.extract_strided_slice %1 {offsets = [0, 19], sizes = [64, 1], strides = [1, 1]} : vector<64x64xf32> to vector<64x1xf32>
    %80 = vector.extract_strided_slice %0 {offsets = [3, 0], sizes = [1, 128], strides = [1, 1]} : vector<24x128xf32> to vector<1x128xf32>
    %81 = vector.broadcast %79 : vector<64x1xf32> to vector<64x128xf32>
    %82 = vector.broadcast %80 : vector<1x128xf32> to vector<64x128xf32>
    %83 = arith.mulf %81, %82 : vector<64x128xf32>
    %84 = arith.addf %78, %83 : vector<64x128xf32>
    %85 = vector.extract_strided_slice %1 {offsets = [0, 20], sizes = [64, 1], strides = [1, 1]} : vector<64x64xf32> to vector<64x1xf32>
    %86 = vector.extract_strided_slice %0 {offsets = [4, 0], sizes = [1, 128], strides = [1, 1]} : vector<24x128xf32> to vector<1x128xf32>
    %87 = vector.broadcast %85 : vector<64x1xf32> to vector<64x128xf32>
    %88 = vector.broadcast %86 : vector<1x128xf32> to vector<64x128xf32>
    %89 = arith.mulf %87, %88 : vector<64x128xf32>
    %90 = arith.addf %84, %89 : vector<64x128xf32>
    %91 = arith.maximumf %60, %90 : vector<64x128xf32>
    %92 = arith.addf %61, %90 : vector<64x128xf32>
    %93 = vector.extract_strided_slice %1 {offsets = [0, 24], sizes = [64, 1], strides = [1, 1]} : vector<64x64xf32> to vector<64x1xf32>
    %94 = vector.extract_strided_slice %0 {offsets = [0, 0], sizes = [1, 128], strides = [1, 1]} : vector<24x128xf32> to vector<1x128xf32>
    %95 = vector.broadcast %93 : vector<64x1xf32> to vector<64x128xf32>
    %96 = vector.broadcast %94 : vector<1x128xf32> to vector<64x128xf32>
    %97 = arith.mulf %95, %96 : vector<64x128xf32>
    %98 = vector.extract_strided_slice %1 {offsets = [0, 25], sizes = [64, 1], strides = [1, 1]} : vector<64x64xf32> to vector<64x1xf32>
    %99 = vector.extract_strided_slice %0 {offsets = [1, 0], sizes = [1, 128], strides = [1, 1]} : vector<24x128xf32> to vector<1x128xf32>
    %100 = vector.broadcast %98 : vector<64x1xf32> to vector<64x128xf32>
    %101 = vector.broadcast %99 : vector<1x128xf32> to vector<64x128xf32>
    %102 = arith.mulf %100, %101 : vector<64x128xf32>
    %103 = arith.addf %97, %102 : vector<64x128xf32>
    %104 = vector.extract_strided_slice %1 {offsets = [0, 26], sizes = [64, 1], strides = [1, 1]} : vector<64x64xf32> to vector<64x1xf32>
    %105 = vector.extract_strided_slice %0 {offsets = [2, 0], sizes = [1, 128], strides = [1, 1]} : vector<24x128xf32> to vector<1x128xf32>
    %106 = vector.broadcast %104 : vector<64x1xf32> to vector<64x128xf32>
    %107 = vector.broadcast %105 : vector<1x128xf32> to vector<64x128xf32>
    %108 = arith.mulf %106, %107 : vector<64x128xf32>
    %109 = arith.addf %103, %108 : vector<64x128xf32>
    %110 = vector.extract_strided_slice %1 {offsets = [0, 27], sizes = [64, 1], strides = [1, 1]} : vector<64x64xf32> to vector<64x1xf32>
    %111 = vector.extract_strided_slice %0 {offsets = [3, 0], sizes = [1, 128], strides = [1, 1]} : vector<24x128xf32> to vector<1x128xf32>
    %112 = vector.broadcast %110 : vector<64x1xf32> to vector<64x128xf32>
    %113 = vector.broadcast %111 : vector<1x128xf32> to vector<64x128xf32>
    %114 = arith.mulf %112, %113 : vector<64x128xf32>
    %115 = arith.addf %109, %114 : vector<64x128xf32>
    %116 = vector.extract_strided_slice %1 {offsets = [0, 28], sizes = [64, 1], strides = [1, 1]} : vector<64x64xf32> to vector<64x1xf32>
    %117 = vector.extract_strided_slice %0 {offsets = [4, 0], sizes = [1, 128], strides = [1, 1]} : vector<24x128xf32> to vector<1x128xf32>
    %118 = vector.broadcast %116 : vector<64x1xf32> to vector<64x128xf32>
    %119 = vector.broadcast %117 : vector<1x128xf32> to vector<64x128xf32>
    %120 = arith.mulf %118, %119 : vector<64x128xf32>
    %121 = arith.addf %115, %120 : vector<64x128xf32>
    %122 = arith.maximumf %91, %121 : vector<64x128xf32>
    %123 = arith.addf %92, %121 : vector<64x128xf32>
    %124 = vector.extract_strided_slice %1 {offsets = [0, 32], sizes = [64, 1], strides = [1, 1]} : vector<64x64xf32> to vector<64x1xf32>
    %125 = vector.extract_strided_slice %0 {offsets = [0, 0], sizes = [1, 128], strides = [1, 1]} : vector<24x128xf32> to vector<1x128xf32>
    %126 = vector.broadcast %124 : vector<64x1xf32> to vector<64x128xf32>
    %127 = vector.broadcast %125 : vector<1x128xf32> to vector<64x128xf32>
    %128 = arith.mulf %126, %127 : vector<64x128xf32>
    %129 = vector.extract_strided_slice %1 {offsets = [0, 33], sizes = [64, 1], strides = [1, 1]} : vector<64x64xf32> to vector<64x1xf32>
    %130 = vector.extract_strided_slice %0 {offsets = [1, 0], sizes = [1, 128], strides = [1, 1]} : vector<24x128xf32> to vector<1x128xf32>
    %131 = vector.broadcast %129 : vector<64x1xf32> to vector<64x128xf32>
    %132 = vector.broadcast %130 : vector<1x128xf32> to vector<64x128xf32>
    %133 = arith.mulf %131, %132 : vector<64x128xf32>
    %134 = arith.addf %128, %133 : vector<64x128xf32>
    %135 = vector.extract_strided_slice %1 {offsets = [0, 34], sizes = [64, 1], strides = [1, 1]} : vector<64x64xf32> to vector<64x1xf32>
    %136 = vector.extract_strided_slice %0 {offsets = [2, 0], sizes = [1, 128], strides = [1, 1]} : vector<24x128xf32> to vector<1x128xf32>
    %137 = vector.broadcast %135 : vector<64x1xf32> to vector<64x128xf32>
    %138 = vector.broadcast %136 : vector<1x128xf32> to vector<64x128xf32>
    %139 = arith.mulf %137, %138 : vector<64x128xf32>
    %140 = arith.addf %134, %139 : vector<64x128xf32>
    %141 = vector.extract_strided_slice %1 {offsets = [0, 35], sizes = [64, 1], strides = [1, 1]} : vector<64x64xf32> to vector<64x1xf32>
    %142 = vector.extract_strided_slice %0 {offsets = [3, 0], sizes = [1, 128], strides = [1, 1]} : vector<24x128xf32> to vector<1x128xf32>
    %143 = vector.broadcast %141 : vector<64x1xf32> to vector<64x128xf32>
    %144 = vector.broadcast %142 : vector<1x128xf32> to vector<64x128xf32>
    %145 = arith.mulf %143, %144 : vector<64x128xf32>
    %146 = arith.addf %140, %145 : vector<64x128xf32>
    %147 = vector.extract_strided_slice %1 {offsets = [0, 36], sizes = [64, 1], strides = [1, 1]} : vector<64x64xf32> to vector<64x1xf32>
    %148 = vector.extract_strided_slice %0 {offsets = [4, 0], sizes = [1, 128], strides = [1, 1]} : vector<24x128xf32> to vector<1x128xf32>
    %149 = vector.broadcast %147 : vector<64x1xf32> to vector<64x128xf32>
    %150 = vector.broadcast %148 : vector<1x128xf32> to vector<64x128xf32>
    %151 = arith.mulf %149, %150 : vector<64x128xf32>
    %152 = arith.addf %146, %151 : vector<64x128xf32>
    %153 = arith.maximumf %122, %152 : vector<64x128xf32>
    %154 = arith.addf %123, %152 : vector<64x128xf32>
    %155 = vector.extract_strided_slice %1 {offsets = [0, 40], sizes = [64, 1], strides = [1, 1]} : vector<64x64xf32> to vector<64x1xf32>
    %156 = vector.extract_strided_slice %0 {offsets = [0, 0], sizes = [1, 128], strides = [1, 1]} : vector<24x128xf32> to vector<1x128xf32>
    %157 = vector.broadcast %155 : vector<64x1xf32> to vector<64x128xf32>
    %158 = vector.broadcast %156 : vector<1x128xf32> to vector<64x128xf32>
    %159 = arith.mulf %157, %158 : vector<64x128xf32>
    %160 = vector.extract_strided_slice %1 {offsets = [0, 41], sizes = [64, 1], strides = [1, 1]} : vector<64x64xf32> to vector<64x1xf32>
    %161 = vector.extract_strided_slice %0 {offsets = [1, 0], sizes = [1, 128], strides = [1, 1]} : vector<24x128xf32> to vector<1x128xf32>
    %162 = vector.broadcast %160 : vector<64x1xf32> to vector<64x128xf32>
    %163 = vector.broadcast %161 : vector<1x128xf32> to vector<64x128xf32>
    %164 = arith.mulf %162, %163 : vector<64x128xf32>
    %165 = arith.addf %159, %164 : vector<64x128xf32>
    %166 = vector.extract_strided_slice %1 {offsets = [0, 42], sizes = [64, 1], strides = [1, 1]} : vector<64x64xf32> to vector<64x1xf32>
    %167 = vector.extract_strided_slice %0 {offsets = [2, 0], sizes = [1, 128], strides = [1, 1]} : vector<24x128xf32> to vector<1x128xf32>
    %168 = vector.broadcast %166 : vector<64x1xf32> to vector<64x128xf32>
    %169 = vector.broadcast %167 : vector<1x128xf32> to vector<64x128xf32>
    %170 = arith.mulf %168, %169 : vector<64x128xf32>
    %171 = arith.addf %165, %170 : vector<64x128xf32>
    %172 = vector.extract_strided_slice %1 {offsets = [0, 43], sizes = [64, 1], strides = [1, 1]} : vector<64x64xf32> to vector<64x1xf32>
    %173 = vector.extract_strided_slice %0 {offsets = [3, 0], sizes = [1, 128], strides = [1, 1]} : vector<24x128xf32> to vector<1x128xf32>
    %174 = vector.broadcast %172 : vector<64x1xf32> to vector<64x128xf32>
    %175 = vector.broadcast %173 : vector<1x128xf32> to vector<64x128xf32>
    %176 = arith.mulf %174, %175 : vector<64x128xf32>
    %177 = arith.addf %171, %176 : vector<64x128xf32>
    %178 = vector.extract_strided_slice %1 {offsets = [0, 44], sizes = [64, 1], strides = [1, 1]} : vector<64x64xf32> to vector<64x1xf32>
    %179 = vector.extract_strided_slice %0 {offsets = [4, 0], sizes = [1, 128], strides = [1, 1]} : vector<24x128xf32> to vector<1x128xf32>
    %180 = vector.broadcast %178 : vector<64x1xf32> to vector<64x128xf32>
    %181 = vector.broadcast %179 : vector<1x128xf32> to vector<64x128xf32>
    %182 = arith.mulf %180, %181 : vector<64x128xf32>
    %183 = arith.addf %177, %182 : vector<64x128xf32>
    %184 = arith.maximumf %153, %183 : vector<64x128xf32>
    %185 = arith.addf %154, %183 : vector<64x128xf32>
    %186 = vector.extract_strided_slice %1 {offsets = [0, 48], sizes = [64, 1], strides = [1, 1]} : vector<64x64xf32> to vector<64x1xf32>
    %187 = vector.extract_strided_slice %0 {offsets = [0, 0], sizes = [1, 128], strides = [1, 1]} : vector<24x128xf32> to vector<1x128xf32>
    %188 = vector.broadcast %186 : vector<64x1xf32> to vector<64x128xf32>
    %189 = vector.broadcast %187 : vector<1x128xf32> to vector<64x128xf32>
    %190 = arith.mulf %188, %189 : vector<64x128xf32>
    %191 = vector.extract_strided_slice %1 {offsets = [0, 49], sizes = [64, 1], strides = [1, 1]} : vector<64x64xf32> to vector<64x1xf32>
    %192 = vector.extract_strided_slice %0 {offsets = [1, 0], sizes = [1, 128], strides = [1, 1]} : vector<24x128xf32> to vector<1x128xf32>
    %193 = vector.broadcast %191 : vector<64x1xf32> to vector<64x128xf32>
    %194 = vector.broadcast %192 : vector<1x128xf32> to vector<64x128xf32>
    %195 = arith.mulf %193, %194 : vector<64x128xf32>
    %196 = arith.addf %190, %195 : vector<64x128xf32>
    %197 = vector.extract_strided_slice %1 {offsets = [0, 50], sizes = [64, 1], strides = [1, 1]} : vector<64x64xf32> to vector<64x1xf32>
    %198 = vector.extract_strided_slice %0 {offsets = [2, 0], sizes = [1, 128], strides = [1, 1]} : vector<24x128xf32> to vector<1x128xf32>
    %199 = vector.broadcast %197 : vector<64x1xf32> to vector<64x128xf32>
    %200 = vector.broadcast %198 : vector<1x128xf32> to vector<64x128xf32>
    %201 = arith.mulf %199, %200 : vector<64x128xf32>
    %202 = arith.addf %196, %201 : vector<64x128xf32>
    %203 = vector.extract_strided_slice %1 {offsets = [0, 51], sizes = [64, 1], strides = [1, 1]} : vector<64x64xf32> to vector<64x1xf32>
    %204 = vector.extract_strided_slice %0 {offsets = [3, 0], sizes = [1, 128], strides = [1, 1]} : vector<24x128xf32> to vector<1x128xf32>
    %205 = vector.broadcast %203 : vector<64x1xf32> to vector<64x128xf32>
    %206 = vector.broadcast %204 : vector<1x128xf32> to vector<64x128xf32>
    %207 = arith.mulf %205, %206 : vector<64x128xf32>
    %208 = arith.addf %202, %207 : vector<64x128xf32>
    %209 = vector.extract_strided_slice %1 {offsets = [0, 52], sizes = [64, 1], strides = [1, 1]} : vector<64x64xf32> to vector<64x1xf32>
    %210 = vector.extract_strided_slice %0 {offsets = [4, 0], sizes = [1, 128], strides = [1, 1]} : vector<24x128xf32> to vector<1x128xf32>
    %211 = vector.broadcast %209 : vector<64x1xf32> to vector<64x128xf32>
    %212 = vector.broadcast %210 : vector<1x128xf32> to vector<64x128xf32>
    %213 = arith.mulf %211, %212 : vector<64x128xf32>
    %214 = arith.addf %208, %213 : vector<64x128xf32>
    %215 = arith.maximumf %184, %214 : vector<64x128xf32>
    %216 = arith.addf %185, %214 : vector<64x128xf32>
    %217 = vector.extract_strided_slice %1 {offsets = [0, 56], sizes = [64, 1], strides = [1, 1]} : vector<64x64xf32> to vector<64x1xf32>
    %218 = vector.extract_strided_slice %0 {offsets = [0, 0], sizes = [1, 128], strides = [1, 1]} : vector<24x128xf32> to vector<1x128xf32>
    %219 = vector.broadcast %217 : vector<64x1xf32> to vector<64x128xf32>
    %220 = vector.broadcast %218 : vector<1x128xf32> to vector<64x128xf32>
    %221 = arith.mulf %219, %220 : vector<64x128xf32>
    %222 = vector.extract_strided_slice %1 {offsets = [0, 57], sizes = [64, 1], strides = [1, 1]} : vector<64x64xf32> to vector<64x1xf32>
    %223 = vector.extract_strided_slice %0 {offsets = [1, 0], sizes = [1, 128], strides = [1, 1]} : vector<24x128xf32> to vector<1x128xf32>
    %224 = vector.broadcast %222 : vector<64x1xf32> to vector<64x128xf32>
    %225 = vector.broadcast %223 : vector<1x128xf32> to vector<64x128xf32>
    %226 = arith.mulf %224, %225 : vector<64x128xf32>
    %227 = arith.addf %221, %226 : vector<64x128xf32>
    %228 = vector.extract_strided_slice %1 {offsets = [0, 58], sizes = [64, 1], strides = [1, 1]} : vector<64x64xf32> to vector<64x1xf32>
    %229 = vector.extract_strided_slice %0 {offsets = [2, 0], sizes = [1, 128], strides = [1, 1]} : vector<24x128xf32> to vector<1x128xf32>
    %230 = vector.broadcast %228 : vector<64x1xf32> to vector<64x128xf32>
    %231 = vector.broadcast %229 : vector<1x128xf32> to vector<64x128xf32>
    %232 = arith.mulf %230, %231 : vector<64x128xf32>
    %233 = arith.addf %227, %232 : vector<64x128xf32>
    %234 = vector.extract_strided_slice %1 {offsets = [0, 59], sizes = [64, 1], strides = [1, 1]} : vector<64x64xf32> to vector<64x1xf32>
    %235 = vector.extract_strided_slice %0 {offsets = [3, 0], sizes = [1, 128], strides = [1, 1]} : vector<24x128xf32> to vector<1x128xf32>
    %236 = vector.broadcast %234 : vector<64x1xf32> to vector<64x128xf32>
    %237 = vector.broadcast %235 : vector<1x128xf32> to vector<64x128xf32>
    %238 = arith.mulf %236, %237 : vector<64x128xf32>
    %239 = arith.addf %233, %238 : vector<64x128xf32>
    %240 = vector.extract_strided_slice %1 {offsets = [0, 60], sizes = [64, 1], strides = [1, 1]} : vector<64x64xf32> to vector<64x1xf32>
    %241 = vector.extract_strided_slice %0 {offsets = [4, 0], sizes = [1, 128], strides = [1, 1]} : vector<24x128xf32> to vector<1x128xf32>
    %242 = vector.broadcast %240 : vector<64x1xf32> to vector<64x128xf32>
    %243 = vector.broadcast %241 : vector<1x128xf32> to vector<64x128xf32>
    %244 = arith.mulf %242, %243 : vector<64x128xf32>
    %245 = arith.addf %239, %244 : vector<64x128xf32>
    %246 = arith.maximumf %215, %245 : vector<64x128xf32>
    %247 = arith.addf %216, %245 : vector<64x128xf32>
    %c0_3 = arith.constant 0 : index
    %c0_4 = arith.constant 0 : index
    %248 = vector.load %arg2[%c0_3, %c0_4] : memref<32x16xf32, #tpu.memory_space<vmem>>, vector<32x16xf32>
    %249 = vector.extract_strided_slice %0 {offsets = [16, 0], sizes = [1, 128], strides = [1, 1]} : vector<24x128xf32> to vector<1x128xf32>
    %250 = vector.extract_strided_slice %248 {offsets = [0, 0], sizes = [32, 1], strides = [1, 1]} : vector<32x16xf32> to vector<32x1xf32>
    %251 = vector.extract_strided_slice %0 {offsets = [8, 0], sizes = [1, 128], strides = [1, 1]} : vector<24x128xf32> to vector<1x128xf32>
    %252 = vector.broadcast %250 : vector<32x1xf32> to vector<32x128xf32>
    %253 = vector.broadcast %251 : vector<1x128xf32> to vector<32x128xf32>
    %254 = arith.mulf %252, %253 : vector<32x128xf32>
    %255 = vector.broadcast %249 : vector<1x128xf32> to vector<32x128xf32>
    %256 = arith.addf %255, %254 : vector<32x128xf32>
    %257 = vector.extract_strided_slice %248 {offsets = [0, 8], sizes = [32, 1], strides = [1, 1]} : vector<32x16xf32> to vector<32x1xf32>
    %258 = vector.extract_strided_slice %0 {offsets = [12, 0], sizes = [1, 128], strides = [1, 1]} : vector<24x128xf32> to vector<1x128xf32>
    %259 = vector.broadcast %257 : vector<32x1xf32> to vector<32x128xf32>
    %260 = vector.broadcast %258 : vector<1x128xf32> to vector<32x128xf32>
    %261 = arith.mulf %259, %260 : vector<32x128xf32>
    %262 = arith.addf %256, %261 : vector<32x128xf32>
    %263 = vector.extract_strided_slice %248 {offsets = [0, 1], sizes = [32, 1], strides = [1, 1]} : vector<32x16xf32> to vector<32x1xf32>
    %264 = vector.extract_strided_slice %0 {offsets = [9, 0], sizes = [1, 128], strides = [1, 1]} : vector<24x128xf32> to vector<1x128xf32>
    %265 = vector.broadcast %263 : vector<32x1xf32> to vector<32x128xf32>
    %266 = vector.broadcast %264 : vector<1x128xf32> to vector<32x128xf32>
    %267 = arith.mulf %265, %266 : vector<32x128xf32>
    %268 = arith.addf %262, %267 : vector<32x128xf32>
    %269 = vector.extract_strided_slice %248 {offsets = [0, 9], sizes = [32, 1], strides = [1, 1]} : vector<32x16xf32> to vector<32x1xf32>
    %270 = vector.extract_strided_slice %0 {offsets = [13, 0], sizes = [1, 128], strides = [1, 1]} : vector<24x128xf32> to vector<1x128xf32>
    %271 = vector.broadcast %269 : vector<32x1xf32> to vector<32x128xf32>
    %272 = vector.broadcast %270 : vector<1x128xf32> to vector<32x128xf32>
    %273 = arith.mulf %271, %272 : vector<32x128xf32>
    %274 = arith.addf %268, %273 : vector<32x128xf32>
    %275 = vector.extract_strided_slice %248 {offsets = [0, 2], sizes = [32, 1], strides = [1, 1]} : vector<32x16xf32> to vector<32x1xf32>
    %276 = vector.extract_strided_slice %0 {offsets = [10, 0], sizes = [1, 128], strides = [1, 1]} : vector<24x128xf32> to vector<1x128xf32>
    %277 = vector.broadcast %275 : vector<32x1xf32> to vector<32x128xf32>
    %278 = vector.broadcast %276 : vector<1x128xf32> to vector<32x128xf32>
    %279 = arith.mulf %277, %278 : vector<32x128xf32>
    %280 = arith.addf %274, %279 : vector<32x128xf32>
    %281 = vector.extract_strided_slice %248 {offsets = [0, 10], sizes = [32, 1], strides = [1, 1]} : vector<32x16xf32> to vector<32x1xf32>
    %282 = vector.extract_strided_slice %0 {offsets = [14, 0], sizes = [1, 128], strides = [1, 1]} : vector<24x128xf32> to vector<1x128xf32>
    %283 = vector.broadcast %281 : vector<32x1xf32> to vector<32x128xf32>
    %284 = vector.broadcast %282 : vector<1x128xf32> to vector<32x128xf32>
    %285 = arith.mulf %283, %284 : vector<32x128xf32>
    %286 = arith.addf %280, %285 : vector<32x128xf32>
    %287 = vector.extract_strided_slice %248 {offsets = [0, 3], sizes = [32, 1], strides = [1, 1]} : vector<32x16xf32> to vector<32x1xf32>
    %288 = vector.extract_strided_slice %0 {offsets = [11, 0], sizes = [1, 128], strides = [1, 1]} : vector<24x128xf32> to vector<1x128xf32>
    %289 = vector.broadcast %287 : vector<32x1xf32> to vector<32x128xf32>
    %290 = vector.broadcast %288 : vector<1x128xf32> to vector<32x128xf32>
    %291 = arith.mulf %289, %290 : vector<32x128xf32>
    %292 = arith.addf %286, %291 : vector<32x128xf32>
    %293 = vector.extract_strided_slice %248 {offsets = [0, 11], sizes = [32, 1], strides = [1, 1]} : vector<32x16xf32> to vector<32x1xf32>
    %294 = vector.extract_strided_slice %0 {offsets = [15, 0], sizes = [1, 128], strides = [1, 1]} : vector<24x128xf32> to vector<1x128xf32>
    %295 = vector.broadcast %293 : vector<32x1xf32> to vector<32x128xf32>
    %296 = vector.broadcast %294 : vector<1x128xf32> to vector<32x128xf32>
    %297 = arith.mulf %295, %296 : vector<32x128xf32>
    %298 = arith.addf %292, %297 : vector<32x128xf32>
    %299 = vector.extract_strided_slice %248 {offsets = [0, 4], sizes = [32, 1], strides = [1, 1]} : vector<32x16xf32> to vector<32x1xf32>
    %cst = arith.constant 1.000000e+00 : f32
    %300 = vector.broadcast %cst : f32 to vector<32x1xf32>
    %301 = arith.maximumf %299, %300 : vector<32x1xf32>
    %cst_5 = arith.constant 1.000000e+00 : f32
    %302 = vector.broadcast %cst_5 : f32 to vector<32x1xf32>
    %303 = arith.divf %302, %301 : vector<32x1xf32>
    %304 = vector.extract_strided_slice %248 {offsets = [0, 12], sizes = [32, 1], strides = [1, 1]} : vector<32x16xf32> to vector<32x1xf32>
    %cst_6 = arith.constant 1.000000e+00 : f32
    %305 = vector.broadcast %cst_6 : f32 to vector<32x1xf32>
    %306 = arith.maximumf %304, %305 : vector<32x1xf32>
    %cst_7 = arith.constant 1.000000e+00 : f32
    %307 = vector.broadcast %cst_7 : f32 to vector<32x1xf32>
    %308 = arith.divf %307, %306 : vector<32x1xf32>
    %309 = vector.extract_strided_slice %246 {offsets = [0, 0], sizes = [32, 128], strides = [1, 1]} : vector<64x128xf32> to vector<32x128xf32>
    %310 = vector.extract_strided_slice %246 {offsets = [32, 0], sizes = [32, 128], strides = [1, 1]} : vector<64x128xf32> to vector<32x128xf32>
    %311 = vector.extract_strided_slice %247 {offsets = [0, 0], sizes = [32, 128], strides = [1, 1]} : vector<64x128xf32> to vector<32x128xf32>
    %312 = vector.extract_strided_slice %247 {offsets = [32, 0], sizes = [32, 128], strides = [1, 1]} : vector<64x128xf32> to vector<32x128xf32>
    %c64_i32 = arith.constant 64 : i32
    %313 = tpu.dynamic_rotate %311 by %c64_i32 dim 1 : vector<32x128xf32>, i32 -> vector<32x128xf32>
    %314 = vector.broadcast %303 : vector<32x1xf32> to vector<32x128xf32>
    %315 = arith.mulf %313, %314 : vector<32x128xf32>
    %316 = arith.subf %309, %315 : vector<32x128xf32>
    %c64_i32_8 = arith.constant 64 : i32
    %317 = tpu.dynamic_rotate %310 by %c64_i32_8 dim 1 : vector<32x128xf32>, i32 -> vector<32x128xf32>
    %318 = vector.broadcast %308 : vector<32x1xf32> to vector<32x128xf32>
    %319 = arith.mulf %312, %318 : vector<32x128xf32>
    %320 = arith.subf %317, %319 : vector<32x128xf32>
    %321 = tpu.iota {dimensions = array<i32: 1>} : vector<32x128xi32>
    %c64_i32_9 = arith.constant 64 : i32
    %322 = vector.broadcast %c64_i32_9 : i32 to vector<32x128xi32>
    %323 = arith.cmpi slt, %321, %322 : vector<32x128xi32>
    %324 = arith.select %323, %316, %320 : vector<32x128xi1>, vector<32x128xf32>
    %325 = arith.addf %324, %298 : vector<32x128xf32>
    %cst_10 = arith.constant 0.000000e+00 : f32
    %326 = vector.broadcast %cst_10 : f32 to vector<32x128xf32>
    %327 = arith.maximumf %325, %326 : vector<32x128xf32>
    %c0_11 = arith.constant 0 : index
    %c0_12 = arith.constant 0 : index
    %328 = vector.load %arg4[%c0_11, %c0_12] : memref<32x128xf32, #tpu.memory_space<vmem>>, vector<32x128xf32>
    tpu.vector_store %arg4[%c0_11, %c0_12], %327 {strides = array<i32>} : memref<32x128xf32, #tpu.memory_space<vmem>>, vector<32x128xf32>,
    return
  }
  func.func @transform_0(%arg0: i32) -> (i32, i32) {
    %c0_i32 = arith.constant 0 : i32
    %c0_i32_0 = arith.constant 0 : i32
    return %arg0, %c0_i32 : i32, i32
  }
  func.func @transform_1(%arg0: i32) -> (i32, i32) {
    %c0_i32 = arith.constant 0 : i32
    %c0_i32_0 = arith.constant 0 : i32
    return %arg0, %c0_i32 : i32, i32
  }
  func.func @transform_2(%arg0: i32) -> (i32, i32) {
    %c0_i32 = arith.constant 0 : i32
    %c0_i32_0 = arith.constant 0 : i32
    %c0_i32_1 = arith.constant 0 : i32
    return %c0_i32, %c0_i32_0 : i32, i32
  }
  func.func @transform_3(%arg0: i32) -> (i32, i32) {
    %c0_i32 = arith.constant 0 : i32
    %c0_i32_0 = arith.constant 0 : i32
    return %arg0, %c0_i32 : i32, i32
  }
}

</mosaic_0001>

<llo_original>
// kernel: tpu_custom_call.1
$region0: #{tpu_custom_call.1}
  #allocation0 [shape = 'u32[]', space=smem, size = 0x4, offset = 0x4, fixed_abs, tag = 'smem constant byte address 0x4 - core index']
  #allocation1 [shape = 'u32[72,128]{1,0:T(1,128)}', space=vmem, size = 0x9000, scoped, tag = 'internal scratch']
  %s0 = inlined_call_operand.vmem [shape: f32[128,64], index: 0, kind: input, shape index: {}]
  %s1 = inlined_call_operand.vmem [shape: f32[64,16], index: 1, kind: input, shape index: {}]
  %s2 = inlined_call_operand.vmem [shape: f32[24,128], index: 2, kind: input, shape index: {}]
  %s3 = inlined_call_operand.hbm [shape: f32[64,128], index: 3, kind: output, shape index: {}]
  %s4 = sld [smem:[#allocation0]]
  $region45: #{tpu_custom_call.1} parent=0
    _
  %s6 = ssub.s32 1, %s4
  %s7 = scalar_select 0, %s6, %s4
  $region1: #{tpu_custom_call.1} parent=0
    #allocation2 [shape = 'u8[32768]{0}', space=vmem, size = 0x8000, scoped, tag = 'output window, operand 0']
    #allocation3 [shape = 's32[2]{0}', space=sflag, size = 0x8, scoped, tag = 'scoped memory for tpu_custom_call.1']
    %8 = vsyncpa [#allocation3], 0
    %s9 = scalar_lea.sflag [#allocation3], 1
    %10 = vsyncpa %s9, 0
    loop: start=0, step=1, limit=4
    $region2: #{tpu_custom_call.1} parent=1 // loop_pre_header
      _
    $region3: #{tpu_custom_call.1} parent=1 // loop_header
      %s12 = sphi 0, %s16
      %p13 = scmp.ge.s32.totalorder %s12, 4
      %s22 = sphi 0, %s24
      %s25 = sphi 0, %s22
      %s26 = sphi 0, %s25
      %s42 = sphi 0, %s26
      %s48 = sphi 0, %s50
      %s51 = sphi 0, %s48
      %s52 = sphi 0, %s51
      %s68 = sphi 0, %s52
      %s72 = sphi 0, %s72
      %s74 = sphi 0, %s72
      %s75 = sphi 0, %s74
      %s89 = sphi 0, %s75
      %s95 = sphi 0, %s97
      %s98 = sphi 0, %s95
      %s99 = sphi 0, %s98
      %s115 = sphi 0, %s99
    $region4: #{tpu_custom_call.1} parent=1 // loop_header_branch
      %15 = sbr.rel (%p13) target = $region8
    $region5: #{tpu_custom_call.1} parent=1 // loop_body
      %s17 = ssub.s32 %s12, 1
      %s18 = ssub.s32 %s12, 2
      %s19 = sadd.s32 %s12, 1
      %s20 = ssub.s32 %s12, %s19
      %p21 = scmp.eq.s32.totalorder %s20, 0
      %s23 = sadd.s32 %s22, 1
      %s24 = scalar_select %p21, %s22, %s23
      %p27 = pneg %p21
      %p28 = scmp.eq.s32.totalorder %s12, 1
      %p29 = por %p27, %p28
      %p30 = scmp.ne.s32.totalorder %s22, %s25
      %p31 = scmp.eq.s32.totalorder %s12, 0
      %p32 = por %p30, %p31
      %p33 = scmp.ne.s32.totalorder %s22, %s25
      %p34 = scmp.eq.s32.totalorder %s17, 1
      %p35 = por %p33, %p34
      %p36 = scmp.ne.s32.totalorder %s25, %s26
      %p37 = scmp.eq.s32.totalorder %s17, 0
      %p38 = por %p36, %p37
      %p39 = scmp.ne.s32.totalorder %s25, %s26
      %p40 = scmp.eq.s32.totalorder %s18, 1
      %p41 = por %p39, %p40
      %p43 = scmp.ne.s32.totalorder %s26, %s42
      %p44 = scmp.eq.s32.totalorder %s18, 0
      %p45 = por %p43, %p44
      %s46 = ssub.s32 %s12, %s19
      %p47 = scmp.eq.s32.totalorder %s46, 0
      %s49 = sadd.s32 %s48, 1
      %s50 = scalar_select %p47, %s48, %s49
      %p53 = pneg %p47
      %p54 = scmp.eq.s32.totalorder %s12, 1
      %p55 = por %p53, %p54
      %p56 = scmp.ne.s32.totalorder %s48, %s51
      %p57 = scmp.eq.s32.totalorder %s12, 0
      %p58 = por %p56, %p57
      %p59 = scmp.ne.s32.totalorder %s48, %s51
      %p60 = scmp.eq.s32.totalorder %s17, 1
      %p61 = por %p59, %p60
      %p62 = scmp.ne.s32.totalorder %s51, %s52
      %p63 = scmp.eq.s32.totalorder %s17, 0
      %p64 = por %p62, %p63
      %p65 = scmp.ne.s32.totalorder %s51, %s52
      %p66 = scmp.eq.s32.totalorder %s18, 1
      %p67 = por %p65, %p66
      %p69 = scmp.ne.s32.totalorder %s52, %s68
      %p70 = scmp.eq.s32.totalorder %s18, 0
      %p71 = por %p69, %p70
      %s73 = sadd.s32 %s72, 1
      %p76 = scmp.eq.s32.totalorder %s12, 1
      %p77 = scmp.ne.s32.totalorder %s72, %s74
      %p78 = scmp.eq.s32.totalorder %s12, 0
      %p79 = por %p77, %p78
      %p80 = scmp.ne.s32.totalorder %s72, %s74
      %p81 = scmp.eq.s32.totalorder %s17, 1
      %p82 = por %p80, %p81
      %p83 = scmp.ne.s32.totalorder %s74, %s75
      %p84 = scmp.eq.s32.totalorder %s17, 0
      %p85 = por %p83, %p84
      %p86 = scmp.ne.s32.totalorder %s74, %s75
      %p87 = scmp.eq.s32.totalorder %s18, 1
      %p88 = por %p86, %p87
      %p90 = scmp.ne.s32.totalorder %s75, %s89
      %p91 = scmp.eq.s32.totalorder %s18, 0
      %p92 = por %p90, %p91
      %s93 = ssub.s32 %s12, %s19
      %p94 = scmp.eq.s32.totalorder %s93, 0
      %s96 = sadd.s32 %s95, 1
      %s97 = scalar_select %p94, %s95, %s96
      %p100 = pneg %p94
      %p101 = scmp.eq.s32.totalorder %s12, 1
      %p102 = por %p100, %p101
      %p103 = scmp.ne.s32.totalorder %s95, %s98
      %p104 = scmp.eq.s32.totalorder %s12, 0
      %p105 = por %p103, %p104
      %p106 = scmp.ne.s32.totalorder %s95, %s98
      %p107 = scmp.eq.s32.totalorder %s17, 1
      %p108 = por %p106, %p107
      %p109 = scmp.ne.s32.totalorder %s98, %s99
      %p110 = scmp.eq.s32.totalorder %s17, 0
      %p111 = por %p109, %p110
      %p112 = scmp.ne.s32.totalorder %s98, %s99
      %p113 = scmp.eq.s32.totalorder %s18, 1
      %p114 = por %p112, %p113
      %p116 = scmp.ne.s32.totalorder %s99, %s115
      %p117 = scmp.eq.s32.totalorder %s18, 0
      %p118 = por %p116, %p117
      %p119 = scmp.le.s32.totalorder 1, %s12
      %p120 = scmp.lt.s32.totalorder %s12, 3
      %p121 = pnand %p119, %p120
      %p122 = pneg %p121
      // Predicated region
      $region9: #{tpu_custom_call.1} parent=5 // pred_check
        _
      $region10: #{tpu_custom_call.1} parent=5 // pred_check_branch
        %124 = sbr.rel (%p121) target = $region12
      $region11: #{tpu_custom_call.1} parent=5 // pred_region
        %s125 = ssub.s32 %s12, 1
        // Predicated region
        $region13: #{tpu_custom_call.1} parent=11 // pred_check
          %p126 = pneg %p85
        $region14: #{tpu_custom_call.1} parent=11 // pred_check_branch
          %128 = sbr.rel (%p126) target = $region16
        $region15: #{tpu_custom_call.1} parent=11 // pred_region
          _
        $region16: #{tpu_custom_call.1} parent=11 // pred_fallthru
          _
      $region12: #{tpu_custom_call.1} parent=5 // pred_fallthru
        _
      %p129 = scmp.lt.s32.totalorder %s12, 2
      // Predicated region
      $region17: #{tpu_custom_call.1} parent=5 // pred_check
        %p130 = pneg %p129
      $region18: #{tpu_custom_call.1} parent=5 // pred_check_branch
        %132 = sbr.rel (%p130) target = $region20
      $region19: #{tpu_custom_call.1} parent=5 // pred_region
        // Predicated region
        $region21: #{tpu_custom_call.1} parent=19 // pred_check
          %p133 = pneg %p32
        $region22: #{tpu_custom_call.1} parent=19 // pred_check_branch
          %135 = sbr.rel (%p133) target = $region24
        $region23: #{tpu_custom_call.1} parent=19 // pred_region
          %s136 = smul.u32 8, %s12
          %p137 = scmp.lt.s32.totalorder %s136, 15
          %s138 = scalar_select %p137, %s136, 15
          %s139 = smul.addr %s138, 8
          %s140 = scalar_lea.vmem %s0, %s139
          %s141 = smul.u32 8, %s12
        $region24: #{tpu_custom_call.1} parent=19 // pred_fallthru
          _
        // Predicated region
        $region25: #{tpu_custom_call.1} parent=19 // pred_check
          %p142 = pneg %p58
        $region26: #{tpu_custom_call.1} parent=19 // pred_check_branch
          %144 = sbr.rel (%p142) target = $region28
        $region27: #{tpu_custom_call.1} parent=19 // pred_region
          %s145 = smul.u32 4, %s12
          %p146 = scmp.lt.s32.totalorder %s145, 7
          %s147 = scalar_select %p146, %s145, 7
          %s148 = smul.addr %s147, 8
          %s149 = scalar_lea.vmem %s1, %s148
          %s150 = smul.u32 4, %s12
        $region28: #{tpu_custom_call.1} parent=19 // pred_fallthru
          _
      $region20: #{tpu_custom_call.1} parent=5 // pred_fallthru
        _
      %p151 = scmp.le.s32.totalorder 1, %s12
      %p152 = scmp.lt.s32.totalorder %s12, 3
      %p153 = pnand %p151, %p152
      %p154 = pneg %p153
      // Predicated region
      $region29: #{tpu_custom_call.1} parent=5 // pred_check
        _
      $region30: #{tpu_custom_call.1} parent=5 // pred_check_branch
        %156 = sbr.rel (%p153) target = $region32
      $region31: #{tpu_custom_call.1} parent=5 // pred_region
        %s157 = ssub.s32 %s12, 1
        %s158 = smul.u32 8, %s17
        %p159 = scmp.lt.s32.totalorder %s158, 15
        %s160 = scalar_select %p159, %s158, 15
        %s161 = smul.addr %s160, 8
        %s162 = scalar_lea.vmem %s0, %s161
        %p163 = pneg %p38
        %p164 = pneg %p35
        %s165 = smul.u32 4, %s17
        %p166 = scmp.lt.s32.totalorder %s165, 7
        %s167 = scalar_select %p166, %s165, 7
        %s168 = smul.addr %s167, 8
        %s169 = scalar_lea.vmem %s1, %s168
        %p170 = pneg %p64
        %p171 = pneg %p61
        %p172 = pneg %p85
        %p173 = pneg %p82
        %p174 = pneg %p111
        %p175 = pneg %p108
        %s176 = sand.u32 %s98, 1
        %s177 = scalar_lea.sflag [#allocation3], %s176
        %s178 = sand.u32 %s98, 1
        %s179 = smul.addr %s178, 32
        %s180 = scalar_lea.vmem [#allocation2], %s179
        %s181 = smul.u32 8, %s17
        %p182 = scmp.lt.s32.totalorder %s181, 15
        %s183 = scalar_select %p182, %s181, 15
        %s184 = smul.addr %s183, 8
        %s185 = scalar_lea.vmem %s0, %s184
        %s186 = smul.u32 8, %s17
        %s187 = smul.u32 4, %s17
        %p188 = scmp.lt.s32.totalorder %s187, 7
        %s189 = scalar_select %p188, %s187, 7
        %s190 = smul.addr %s189, 8
        %s191 = scalar_lea.vmem %s1, %s190
        %s192 = smul.u32 4, %s17
        %s193 = smul.u32 4, %s17
        %v194 = vld [vmem:[%s2] sm:$0xff]
        %v195 = vld [vmem:[%s2 + $0x8] sm:$0xff]
        %v196 = vld [vmem:[%s2 + $0x10] sm:$0xff]
        %v197 = vld [vmem:[%s185] sm:$0xff]
        %v198 = vld [vmem:[%s185 + $0x8] sm:$0xff]
        %v199 = vld [vmem:[%s185 + $0x10] sm:$0xff]
        %v200 = vld [vmem:[%s185 + $0x18] sm:$0xff]
        %v201 = vld [vmem:[%s185 + $0x20] sm:$0xff]
        %v202 = vld [vmem:[%s185 + $0x28] sm:$0xff]
        %v203 = vld [vmem:[%s185 + $0x30] sm:$0xff]
        %v204 = vld [vmem:[%s185 + $0x38] sm:$0xff]
        %206 = vset.pattern.permute.xlu0 0
        %207 = vperm.xlu0 %206, %v197
        %v208 = vpop.permute.xlu0 %207
        %211 = vset.pattern.permute.xlu0 0
        %212 = vperm.xlu0 %211, %v198
        %v213 = vpop.permute.xlu0 %212
        %216 = vset.pattern.permute.xlu0 0
        %217 = vperm.xlu0 %216, %v199
        %v218 = vpop.permute.xlu0 %217
        %221 = vset.pattern.permute.xlu0 0
        %222 = vperm.xlu0 %221, %v200
        %v223 = vpop.permute.xlu0 %222
        %226 = vset.pattern.permute.xlu0 0
        %227 = vperm.xlu0 %226, %v201
        %v228 = vpop.permute.xlu0 %227
        %231 = vset.pattern.permute.xlu0 0
        %232 = vperm.xlu0 %231, %v202
        %v233 = vpop.permute.xlu0 %232
        %236 = vset.pattern.permute.xlu0 0
        %237 = vperm.xlu0 %236, %v203
        %v238 = vpop.permute.xlu0 %237
        %241 = vset.pattern.permute.xlu0 0
        %242 = vperm.xlu0 %241, %v204
        %v243 = vpop.permute.xlu0 %242
        %v245 = vperm.slane %v194, 0
        %v246 = vmul.f32 %v208, %v245
        %v247 = vmul.f32 %v213, %v245
        %v248 = vmul.f32 %v218, %v245
        %v249 = vmul.f32 %v223, %v245
        %v250 = vmul.f32 %v228, %v245
        %v251 = vmul.f32 %v233, %v245
        %v252 = vmul.f32 %v238, %v245
        %v253 = vmul.f32 %v243, %v245
        %254 = vset.pattern.permute.xlu0 1
        %255 = vperm.xlu0 %254, %v197
        %v256 = vpop.permute.xlu0 %255
        %258 = vset.pattern.permute.xlu0 1
        %259 = vperm.xlu0 %258, %v198
        %v260 = vpop.permute.xlu0 %259
        %262 = vset.pattern.permute.xlu0 1
        %263 = vperm.xlu0 %262, %v199
        %v264 = vpop.permute.xlu0 %263
        %266 = vset.pattern.permute.xlu0 1
        %267 = vperm.xlu0 %266, %v200
        %v268 = vpop.permute.xlu0 %267
        %270 = vset.pattern.permute.xlu0 1
        %271 = vperm.xlu0 %270, %v201
        %v272 = vpop.permute.xlu0 %271
        %274 = vset.pattern.permute.xlu0 1
        %275 = vperm.xlu0 %274, %v202
        %v276 = vpop.permute.xlu0 %275
        %278 = vset.pattern.permute.xlu0 1
        %279 = vperm.xlu0 %278, %v203
        %v280 = vpop.permute.xlu0 %279
        %282 = vset.pattern.permute.xlu0 1
        %283 = vperm.xlu0 %282, %v204
        %v284 = vpop.permute.xlu0 %283
        %v286 = vperm.slane %v194, 1
        %v287 = vmul.f32 %v256, %v286
        %v288 = vmul.f32 %v260, %v286
        %v289 = vmul.f32 %v264, %v286
        %v290 = vmul.f32 %v268, %v286
        %v291 = vmul.f32 %v272, %v286
        %v292 = vmul.f32 %v276, %v286
        %v293 = vmul.f32 %v280, %v286
        %v294 = vmul.f32 %v284, %v286
        %v295 = vadd.f32 %v246, %v287
        %v296 = vadd.f32 %v247, %v288
        %v297 = vadd.f32 %v248, %v289
        %v298 = vadd.f32 %v249, %v290
        %v299 = vadd.f32 %v250, %v291
        %v300 = vadd.f32 %v251, %v292
        %v301 = vadd.f32 %v252, %v293
        %v302 = vadd.f32 %v253, %v294
        %303 = vset.pattern.permute.xlu0 2
        %304 = vperm.xlu0 %303, %v197
        %v305 = vpop.permute.xlu0 %304
        %307 = vset.pattern.permute.xlu0 2
        %308 = vperm.xlu0 %307, %v198
        %v309 = vpop.permute.xlu0 %308
        %311 = vset.pattern.permute.xlu0 2
        %312 = vperm.xlu0 %311, %v199
        %v313 = vpop.permute.xlu0 %312
        %315 = vset.pattern.permute.xlu0 2
        %316 = vperm.xlu0 %315, %v200
        %v317 = vpop.permute.xlu0 %316
        %319 = vset.pattern.permute.xlu0 2
        %320 = vperm.xlu0 %319, %v201
        %v321 = vpop.permute.xlu0 %320
        %323 = vset.pattern.permute.xlu0 2
        %324 = vperm.xlu0 %323, %v202
        %v325 = vpop.permute.xlu0 %324
        %327 = vset.pattern.permute.xlu0 2
        %328 = vperm.xlu0 %327, %v203
        %v329 = vpop.permute.xlu0 %328
        %331 = vset.pattern.permute.xlu0 2
        %332 = vperm.xlu0 %331, %v204
        %v333 = vpop.permute.xlu0 %332
        %v335 = vperm.slane %v194, 2
        %v336 = vmul.f32 %v305, %v335
        %v337 = vmul.f32 %v309, %v335
        %v338 = vmul.f32 %v313, %v335
        %v339 = vmul.f32 %v317, %v335
        %v340 = vmul.f32 %v321, %v335
        %v341 = vmul.f32 %v325, %v335
        %v342 = vmul.f32 %v329, %v335
        %v343 = vmul.f32 %v333, %v335
        %v344 = vadd.f32 %v295, %v336
        %v345 = vadd.f32 %v296, %v337
        %v346 = vadd.f32 %v297, %v338
        %v347 = vadd.f32 %v298, %v339
        %v348 = vadd.f32 %v299, %v340
        %v349 = vadd.f32 %v300, %v341
        %v350 = vadd.f32 %v301, %v342
        %v351 = vadd.f32 %v302, %v343
        %352 = vset.pattern.permute.xlu0 3
        %353 = vperm.xlu0 %352, %v197
        %v354 = vpop.permute.xlu0 %353
        %356 = vset.pattern.permute.xlu0 3
        %357 = vperm.xlu0 %356, %v198
        %v358 = vpop.permute.xlu0 %357
        %360 = vset.pattern.permute.xlu0 3
        %361 = vperm.xlu0 %360, %v199
        %v362 = vpop.permute.xlu0 %361
        %364 = vset.pattern.permute.xlu0 3
        %365 = vperm.xlu0 %364, %v200
        %v366 = vpop.permute.xlu0 %365
        %368 = vset.pattern.permute.xlu0 3
        %369 = vperm.xlu0 %368, %v201
        %v370 = vpop.permute.xlu0 %369
        %372 = vset.pattern.permute.xlu0 3
        %373 = vperm.xlu0 %372, %v202
        %v374 = vpop.permute.xlu0 %373
        %376 = vset.pattern.permute.xlu0 3
        %377 = vperm.xlu0 %376, %v203
        %v378 = vpop.permute.xlu0 %377
        %380 = vset.pattern.permute.xlu0 3
        %381 = vperm.xlu0 %380, %v204
        %v382 = vpop.permute.xlu0 %381
        %v384 = vperm.slane %v194, 3
        %v385 = vmul.f32 %v354, %v384
        %v386 = vmul.f32 %v358, %v384
        %v387 = vmul.f32 %v362, %v384
        %v388 = vmul.f32 %v366, %v384
        %v389 = vmul.f32 %v370, %v384
        %v390 = vmul.f32 %v374, %v384
        %v391 = vmul.f32 %v378, %v384
        %v392 = vmul.f32 %v382, %v384
        %v393 = vadd.f32 %v344, %v385
        %v394 = vadd.f32 %v345, %v386
        %v395 = vadd.f32 %v346, %v387
        %v396 = vadd.f32 %v347, %v388
        %v397 = vadd.f32 %v348, %v389
        %v398 = vadd.f32 %v349, %v390
        %v399 = vadd.f32 %v350, %v391
        %v400 = vadd.f32 %v351, %v392
        %401 = vset.pattern.permute.xlu0 4
        %402 = vperm.xlu0 %401, %v197
        %v403 = vpop.permute.xlu0 %402
        %405 = vset.pattern.permute.xlu0 4
        %406 = vperm.xlu0 %405, %v198
        %v407 = vpop.permute.xlu0 %406
        %409 = vset.pattern.permute.xlu0 4
        %410 = vperm.xlu0 %409, %v199
        %v411 = vpop.permute.xlu0 %410
        %413 = vset.pattern.permute.xlu0 4
        %414 = vperm.xlu0 %413, %v200
        %v415 = vpop.permute.xlu0 %414
        %417 = vset.pattern.permute.xlu0 4
        %418 = vperm.xlu0 %417, %v201
        %v419 = vpop.permute.xlu0 %418
        %421 = vset.pattern.permute.xlu0 4
        %422 = vperm.xlu0 %421, %v202
        %v423 = vpop.permute.xlu0 %422
        %425 = vset.pattern.permute.xlu0 4
        %426 = vperm.xlu0 %425, %v203
        %v427 = vpop.permute.xlu0 %426
        %429 = vset.pattern.permute.xlu0 4
        %430 = vperm.xlu0 %429, %v204
        %v431 = vpop.permute.xlu0 %430
        %v433 = vperm.slane %v194, 4
        %v434 = vmul.f32 %v403, %v433
        %v435 = vmul.f32 %v407, %v433
        %v436 = vmul.f32 %v411, %v433
        %v437 = vmul.f32 %v415, %v433
        %v438 = vmul.f32 %v419, %v433
        %v439 = vmul.f32 %v423, %v433
        %v440 = vmul.f32 %v427, %v433
        %v441 = vmul.f32 %v431, %v433
        %v442 = vadd.f32 %v393, %v434
        %v443 = vadd.f32 %v394, %v435
        %v444 = vadd.f32 %v395, %v436
        %v445 = vadd.f32 %v396, %v437
        %v446 = vadd.f32 %v397, %v438
        %v447 = vadd.f32 %v398, %v439
        %v448 = vadd.f32 %v399, %v440
        %v449 = vadd.f32 %v400, %v441
        %450 = vset.pattern.permute.xlu0 8
        %451 = vperm.xlu0 %450, %v197
        %v452 = vpop.permute.xlu0 %451
        %454 = vset.pattern.permute.xlu0 8
        %455 = vperm.xlu0 %454, %v198
        %v456 = vpop.permute.xlu0 %455
        %458 = vset.pattern.permute.xlu0 8
        %459 = vperm.xlu0 %458, %v199
        %v460 = vpop.permute.xlu0 %459
        %462 = vset.pattern.permute.xlu0 8
        %463 = vperm.xlu0 %462, %v200
        %v464 = vpop.permute.xlu0 %463
        %466 = vset.pattern.permute.xlu0 8
        %467 = vperm.xlu0 %466, %v201
        %v468 = vpop.permute.xlu0 %467
        %470 = vset.pattern.permute.xlu0 8
        %471 = vperm.xlu0 %470, %v202
        %v472 = vpop.permute.xlu0 %471
        %474 = vset.pattern.permute.xlu0 8
        %475 = vperm.xlu0 %474, %v203
        %v476 = vpop.permute.xlu0 %475
        %478 = vset.pattern.permute.xlu0 8
        %479 = vperm.xlu0 %478, %v204
        %v480 = vpop.permute.xlu0 %479
        %v482 = vmul.f32 %v452, %v245
        %v483 = vmul.f32 %v456, %v245
        %v484 = vmul.f32 %v460, %v245
        %v485 = vmul.f32 %v464, %v245
        %v486 = vmul.f32 %v468, %v245
        %v487 = vmul.f32 %v472, %v245
        %v488 = vmul.f32 %v476, %v245
        %v489 = vmul.f32 %v480, %v245
        %490 = vset.pattern.permute.xlu0 9
        %491 = vperm.xlu0 %490, %v197
        %v492 = vpop.permute.xlu0 %491
        %494 = vset.pattern.permute.xlu0 9
        %495 = vperm.xlu0 %494, %v198
        %v496 = vpop.permute.xlu0 %495
        %498 = vset.pattern.permute.xlu0 9
        %499 = vperm.xlu0 %498, %v199
        %v500 = vpop.permute.xlu0 %499
        %502 = vset.pattern.permute.xlu0 9
        %503 = vperm.xlu0 %502, %v200
        %v504 = vpop.permute.xlu0 %503
        %506 = vset.pattern.permute.xlu0 9
        %507 = vperm.xlu0 %506, %v201
        %v508 = vpop.permute.xlu0 %507
        %510 = vset.pattern.permute.xlu0 9
        %511 = vperm.xlu0 %510, %v202
        %v512 = vpop.permute.xlu0 %511
        %514 = vset.pattern.permute.xlu0 9
        %515 = vperm.xlu0 %514, %v203
        %v516 = vpop.permute.xlu0 %515
        %518 = vset.pattern.permute.xlu0 9
        %519 = vperm.xlu0 %518, %v204
        %v520 = vpop.permute.xlu0 %519
        %v522 = vmul.f32 %v492, %v286
        %v523 = vmul.f32 %v496, %v286
        %v524 = vmul.f32 %v500, %v286
        %v525 = vmul.f32 %v504, %v286
        %v526 = vmul.f32 %v508, %v286
        %v527 = vmul.f32 %v512, %v286
        %v528 = vmul.f32 %v516, %v286
        %v529 = vmul.f32 %v520, %v286
        %v530 = vadd.f32 %v482, %v522
        %v531 = vadd.f32 %v483, %v523
        %v532 = vadd.f32 %v484, %v524
        %v533 = vadd.f32 %v485, %v525
        %v534 = vadd.f32 %v486, %v526
        %v535 = vadd.f32 %v487, %v527
        %v536 = vadd.f32 %v488, %v528
        %v537 = vadd.f32 %v489, %v529
        %538 = vset.pattern.permute.xlu0 10
        %539 = vperm.xlu0 %538, %v197
        %v540 = vpop.permute.xlu0 %539
        %542 = vset.pattern.permute.xlu0 10
        %543 = vperm.xlu0 %542, %v198
        %v544 = vpop.permute.xlu0 %543
        %546 = vset.pattern.permute.xlu0 10
        %547 = vperm.xlu0 %546, %v199
        %v548 = vpop.permute.xlu0 %547
        %550 = vset.pattern.permute.xlu0 10
        %551 = vperm.xlu0 %550, %v200
        %v552 = vpop.permute.xlu0 %551
        %554 = vset.pattern.permute.xlu0 10
        %555 = vperm.xlu0 %554, %v201
        %v556 = vpop.permute.xlu0 %555
        %558 = vset.pattern.permute.xlu0 10
        %559 = vperm.xlu0 %558, %v202
        %v560 = vpop.permute.xlu0 %559
        %562 = vset.pattern.permute.xlu0 10
        %563 = vperm.xlu0 %562, %v203
        %v564 = vpop.permute.xlu0 %563
        %566 = vset.pattern.permute.xlu0 10
        %567 = vperm.xlu0 %566, %v204
        %v568 = vpop.permute.xlu0 %567
        %v570 = vmul.f32 %v540, %v335
        %v571 = vmul.f32 %v544, %v335
        %v572 = vmul.f32 %v548, %v335
        %v573 = vmul.f32 %v552, %v335
        %v574 = vmul.f32 %v556, %v335
        %v575 = vmul.f32 %v560, %v335
        %v576 = vmul.f32 %v564, %v335
        %v577 = vmul.f32 %v568, %v335
        %v578 = vadd.f32 %v530, %v570
        %v579 = vadd.f32 %v531, %v571
        %v580 = vadd.f32 %v532, %v572
        %v581 = vadd.f32 %v533, %v573
        %v582 = vadd.f32 %v534, %v574
        %v583 = vadd.f32 %v535, %v575
        %v584 = vadd.f32 %v536, %v576
        %v585 = vadd.f32 %v537, %v577
        %586 = vset.pattern.permute.xlu0 11
        %587 = vperm.xlu0 %586, %v197
        %v588 = vpop.permute.xlu0 %587
        %590 = vset.pattern.permute.xlu0 11
        %591 = vperm.xlu0 %590, %v198
        %v592 = vpop.permute.xlu0 %591
        %594 = vset.pattern.permute.xlu0 11
        %595 = vperm.xlu0 %594, %v199
        %v596 = vpop.permute.xlu0 %595
        %598 = vset.pattern.permute.xlu0 11
        %599 = vperm.xlu0 %598, %v200
        %v600 = vpop.permute.xlu0 %599
        %602 = vset.pattern.permute.xlu0 11
        %603 = vperm.xlu0 %602, %v201
        %v604 = vpop.permute.xlu0 %603
        %606 = vset.pattern.permute.xlu0 11
        %607 = vperm.xlu0 %606, %v202
        %v608 = vpop.permute.xlu0 %607
        %610 = vset.pattern.permute.xlu0 11
        %611 = vperm.xlu0 %610, %v203
        %v612 = vpop.permute.xlu0 %611
        %614 = vset.pattern.permute.xlu0 11
        %615 = vperm.xlu0 %614, %v204
        %v616 = vpop.permute.xlu0 %615
        %v618 = vmul.f32 %v588, %v384
        %v619 = vmul.f32 %v592, %v384
        %v620 = vmul.f32 %v596, %v384
        %v621 = vmul.f32 %v600, %v384
        %v622 = vmul.f32 %v604, %v384
        %v623 = vmul.f32 %v608, %v384
        %v624 = vmul.f32 %v612, %v384
        %v625 = vmul.f32 %v616, %v384
        %v626 = vadd.f32 %v578, %v618
        %v627 = vadd.f32 %v579, %v619
        %v628 = vadd.f32 %v580, %v620
        %v629 = vadd.f32 %v581, %v621
        %v630 = vadd.f32 %v582, %v622
        %v631 = vadd.f32 %v583, %v623
        %v632 = vadd.f32 %v584, %v624
        %v633 = vadd.f32 %v585, %v625
        %634 = vset.pattern.permute.xlu0 12
        %635 = vperm.xlu0 %634, %v197
        %v636 = vpop.permute.xlu0 %635
        %638 = vset.pattern.permute.xlu0 12
        %639 = vperm.xlu0 %638, %v198
        %v640 = vpop.permute.xlu0 %639
        %642 = vset.pattern.permute.xlu0 12
        %643 = vperm.xlu0 %642, %v199
        %v644 = vpop.permute.xlu0 %643
        %646 = vset.pattern.permute.xlu0 12
        %647 = vperm.xlu0 %646, %v200
        %v648 = vpop.permute.xlu0 %647
        %650 = vset.pattern.permute.xlu0 12
        %651 = vperm.xlu0 %650, %v201
        %v652 = vpop.permute.xlu0 %651
        %654 = vset.pattern.permute.xlu0 12
        %655 = vperm.xlu0 %654, %v202
        %v656 = vpop.permute.xlu0 %655
        %658 = vset.pattern.permute.xlu0 12
        %659 = vperm.xlu0 %658, %v203
        %v660 = vpop.permute.xlu0 %659
        %662 = vset.pattern.permute.xlu0 12
        %663 = vperm.xlu0 %662, %v204
        %v664 = vpop.permute.xlu0 %663
        %v666 = vmul.f32 %v636, %v433
        %v667 = vmul.f32 %v640, %v433
        %v668 = vmul.f32 %v644, %v433
        %v669 = vmul.f32 %v648, %v433
        %v670 = vmul.f32 %v652, %v433
        %v671 = vmul.f32 %v656, %v433
        %v672 = vmul.f32 %v660, %v433
        %v673 = vmul.f32 %v664, %v433
        %v674 = vadd.f32 %v626, %v666
        %v675 = vadd.f32 %v627, %v667
        %v676 = vadd.f32 %v628, %v668
        %v677 = vadd.f32 %v629, %v669
        %v678 = vadd.f32 %v630, %v670
        %v679 = vadd.f32 %v631, %v671
        %v680 = vadd.f32 %v632, %v672
        %v681 = vadd.f32 %v633, %v673
        %v682 = vmax.f32 %v442, %v674
        %v683 = vmax.f32 %v443, %v675
        %v684 = vmax.f32 %v444, %v676
        %v685 = vmax.f32 %v445, %v677
        %v686 = vmax.f32 %v446, %v678
        %v687 = vmax.f32 %v447, %v679
        %v688 = vmax.f32 %v448, %v680
        %v689 = vmax.f32 %v449, %v681
        %v690 = vadd.f32 %v442, %v674
        %v691 = vadd.f32 %v443, %v675
        %v692 = vadd.f32 %v444, %v676
        %v693 = vadd.f32 %v445, %v677
        %v694 = vadd.f32 %v446, %v678
        %v695 = vadd.f32 %v447, %v679
        %v696 = vadd.f32 %v448, %v680
        %v697 = vadd.f32 %v449, %v681
        %698 = vset.pattern.permute.xlu0 16
        %699 = vperm.xlu0 %698, %v197
        %v700 = vpop.permute.xlu0 %699
        %702 = vset.pattern.permute.xlu0 16
        %703 = vperm.xlu0 %702, %v198
        %v704 = vpop.permute.xlu0 %703
        %706 = vset.pattern.permute.xlu0 16
        %707 = vperm.xlu0 %706, %v199
        %v708 = vpop.permute.xlu0 %707
        %710 = vset.pattern.permute.xlu0 16
        %711 = vperm.xlu0 %710, %v200
        %v712 = vpop.permute.xlu0 %711
        %714 = vset.pattern.permute.xlu0 16
        %715 = vperm.xlu0 %714, %v201
        %v716 = vpop.permute.xlu0 %715
        %718 = vset.pattern.permute.xlu0 16
        %719 = vperm.xlu0 %718, %v202
        %v720 = vpop.permute.xlu0 %719
        %722 = vset.pattern.permute.xlu0 16
        %723 = vperm.xlu0 %722, %v203
        %v724 = vpop.permute.xlu0 %723
        %726 = vset.pattern.permute.xlu0 16
        %727 = vperm.xlu0 %726, %v204
        %v728 = vpop.permute.xlu0 %727
        %v730 = vmul.f32 %v700, %v245
        %v731 = vmul.f32 %v704, %v245
        %v732 = vmul.f32 %v708, %v245
        %v733 = vmul.f32 %v712, %v245
        %v734 = vmul.f32 %v716, %v245
        %v735 = vmul.f32 %v720, %v245
        %v736 = vmul.f32 %v724, %v245
        %v737 = vmul.f32 %v728, %v245
        %738 = vset.pattern.permute.xlu0 17
        %739 = vperm.xlu0 %738, %v197
        %v740 = vpop.permute.xlu0 %739
        %742 = vset.pattern.permute.xlu0 17
        %743 = vperm.xlu0 %742, %v198
        %v744 = vpop.permute.xlu0 %743
        %746 = vset.pattern.permute.xlu0 17
        %747 = vperm.xlu0 %746, %v199
        %v748 = vpop.permute.xlu0 %747
        %750 = vset.pattern.permute.xlu0 17
        %751 = vperm.xlu0 %750, %v200
        %v752 = vpop.permute.xlu0 %751
        %754 = vset.pattern.permute.xlu0 17
        %755 = vperm.xlu0 %754, %v201
        %v756 = vpop.permute.xlu0 %755
        %758 = vset.pattern.permute.xlu0 17
        %759 = vperm.xlu0 %758, %v202
        %v760 = vpop.permute.xlu0 %759
        %762 = vset.pattern.permute.xlu0 17
        %763 = vperm.xlu0 %762, %v203
        %v764 = vpop.permute.xlu0 %763
        %766 = vset.pattern.permute.xlu0 17
        %767 = vperm.xlu0 %766, %v204
        %v768 = vpop.permute.xlu0 %767
        %v770 = vmul.f32 %v740, %v286
        %v771 = vmul.f32 %v744, %v286
        %v772 = vmul.f32 %v748, %v286
        %v773 = vmul.f32 %v752, %v286
        %v774 = vmul.f32 %v756, %v286
        %v775 = vmul.f32 %v760, %v286
        %v776 = vmul.f32 %v764, %v286
        %v777 = vmul.f32 %v768, %v286
        %v778 = vadd.f32 %v730, %v770
        %v779 = vadd.f32 %v731, %v771
        %v780 = vadd.f32 %v732, %v772
        %v781 = vadd.f32 %v733, %v773
        %v782 = vadd.f32 %v734, %v774
        %v783 = vadd.f32 %v735, %v775
        %v784 = vadd.f32 %v736, %v776
        %v785 = vadd.f32 %v737, %v777
        %786 = vset.pattern.permute.xlu0 18
        %787 = vperm.xlu0 %786, %v197
        %v788 = vpop.permute.xlu0 %787
        %790 = vset.pattern.permute.xlu0 18
        %791 = vperm.xlu0 %790, %v198
        %v792 = vpop.permute.xlu0 %791
        %794 = vset.pattern.permute.xlu0 18
        %795 = vperm.xlu0 %794, %v199
        %v796 = vpop.permute.xlu0 %795
        %798 = vset.pattern.permute.xlu0 18
        %799 = vperm.xlu0 %798, %v200
        %v800 = vpop.permute.xlu0 %799
        %802 = vset.pattern.permute.xlu0 18
        %803 = vperm.xlu0 %802, %v201
        %v804 = vpop.permute.xlu0 %803
        %806 = vset.pattern.permute.xlu0 18
        %807 = vperm.xlu0 %806, %v202
        %v808 = vpop.permute.xlu0 %807
        %810 = vset.pattern.permute.xlu0 18
        %811 = vperm.xlu0 %810, %v203
        %v812 = vpop.permute.xlu0 %811
        %814 = vset.pattern.permute.xlu0 18
        %815 = vperm.xlu0 %814, %v204
        %v816 = vpop.permute.xlu0 %815
        %v818 = vmul.f32 %v788, %v335
        %v819 = vmul.f32 %v792, %v335
        %v820 = vmul.f32 %v796, %v335
        %v821 = vmul.f32 %v800, %v335
        %v822 = vmul.f32 %v804, %v335
        %v823 = vmul.f32 %v808, %v335
        %v824 = vmul.f32 %v812, %v335
        %v825 = vmul.f32 %v816, %v335
        %v826 = vadd.f32 %v778, %v818
        %v827 = vadd.f32 %v779, %v819
        %v828 = vadd.f32 %v780, %v820
        %v829 = vadd.f32 %v781, %v821
        %v830 = vadd.f32 %v782, %v822
        %v831 = vadd.f32 %v783, %v823
        %v832 = vadd.f32 %v784, %v824
        %v833 = vadd.f32 %v785, %v825
        %834 = vset.pattern.permute.xlu0 19
        %835 = vperm.xlu0 %834, %v197
        %v836 = vpop.permute.xlu0 %835
        %838 = vset.pattern.permute.xlu0 19
        %839 = vperm.xlu0 %838, %v198
        %v840 = vpop.permute.xlu0 %839
        %842 = vset.pattern.permute.xlu0 19
        %843 = vperm.xlu0 %842, %v199
        %v844 = vpop.permute.xlu0 %843
        %846 = vset.pattern.permute.xlu0 19
        %847 = vperm.xlu0 %846, %v200
        %v848 = vpop.permute.xlu0 %847
        %850 = vset.pattern.permute.xlu0 19
        %851 = vperm.xlu0 %850, %v201
        %v852 = vpop.permute.xlu0 %851
        %854 = vset.pattern.permute.xlu0 19
        %855 = vperm.xlu0 %854, %v202
        %v856 = vpop.permute.xlu0 %855
        %858 = vset.pattern.permute.xlu0 19
        %859 = vperm.xlu0 %858, %v203
        %v860 = vpop.permute.xlu0 %859
        %862 = vset.pattern.permute.xlu0 19
        %863 = vperm.xlu0 %862, %v204
        %v864 = vpop.permute.xlu0 %863
        %v866 = vmul.f32 %v836, %v384
        %v867 = vmul.f32 %v840, %v384
        %v868 = vmul.f32 %v844, %v384
        %v869 = vmul.f32 %v848, %v384
        %v870 = vmul.f32 %v852, %v384
        %v871 = vmul.f32 %v856, %v384
        %v872 = vmul.f32 %v860, %v384
        %v873 = vmul.f32 %v864, %v384
        %v874 = vadd.f32 %v826, %v866
        %v875 = vadd.f32 %v827, %v867
        %v876 = vadd.f32 %v828, %v868
        %v877 = vadd.f32 %v829, %v869
        %v878 = vadd.f32 %v830, %v870
        %v879 = vadd.f32 %v831, %v871
        %v880 = vadd.f32 %v832, %v872
        %v881 = vadd.f32 %v833, %v873
        %882 = vset.pattern.permute.xlu0 20
        %883 = vperm.xlu0 %882, %v197
        %v884 = vpop.permute.xlu0 %883
        %886 = vset.pattern.permute.xlu0 20
        %887 = vperm.xlu0 %886, %v198
        %v888 = vpop.permute.xlu0 %887
        %890 = vset.pattern.permute.xlu0 20
        %891 = vperm.xlu0 %890, %v199
        %v892 = vpop.permute.xlu0 %891
        %894 = vset.pattern.permute.xlu0 20
        %895 = vperm.xlu0 %894, %v200
        %v896 = vpop.permute.xlu0 %895
        %898 = vset.pattern.permute.xlu0 20
        %899 = vperm.xlu0 %898, %v201
        %v900 = vpop.permute.xlu0 %899
        %902 = vset.pattern.permute.xlu0 20
        %903 = vperm.xlu0 %902, %v202
        %v904 = vpop.permute.xlu0 %903
        %906 = vset.pattern.permute.xlu0 20
        %907 = vperm.xlu0 %906, %v203
        %v908 = vpop.permute.xlu0 %907
        %910 = vset.pattern.permute.xlu0 20
        %911 = vperm.xlu0 %910, %v204
        %v912 = vpop.permute.xlu0 %911
        %v914 = vmul.f32 %v884, %v433
        %v915 = vmul.f32 %v888, %v433
        %v916 = vmul.f32 %v892, %v433
        %v917 = vmul.f32 %v896, %v433
        %v918 = vmul.f32 %v900, %v433
        %v919 = vmul.f32 %v904, %v433
        %v920 = vmul.f32 %v908, %v433
        %v921 = vmul.f32 %v912, %v433
        %v922 = vadd.f32 %v874, %v914
        %v923 = vadd.f32 %v875, %v915
        %v924 = vadd.f32 %v876, %v916
        %v925 = vadd.f32 %v877, %v917
        %v926 = vadd.f32 %v878, %v918
        %v927 = vadd.f32 %v879, %v919
        %v928 = vadd.f32 %v880, %v920
        %v929 = vadd.f32 %v881, %v921
        %v930 = vmax.f32 %v682, %v922
        %v931 = vmax.f32 %v683, %v923
        %v932 = vmax.f32 %v684, %v924
        %v933 = vmax.f32 %v685, %v925
        %v934 = vmax.f32 %v686, %v926
        %v935 = vmax.f32 %v687, %v927
        %v936 = vmax.f32 %v688, %v928
        %v937 = vmax.f32 %v689, %v929
        %v938 = vadd.f32 %v690, %v922
        %v939 = vadd.f32 %v691, %v923
        %v940 = vadd.f32 %v692, %v924
        %v941 = vadd.f32 %v693, %v925
        %v942 = vadd.f32 %v694, %v926
        %v943 = vadd.f32 %v695, %v927
        %v944 = vadd.f32 %v696, %v928
        %v945 = vadd.f32 %v697, %v929
        %946 = vset.pattern.permute.xlu0 24
        %947 = vperm.xlu0 %946, %v197
        %v948 = vpop.permute.xlu0 %947
        %950 = vset.pattern.permute.xlu0 24
        %951 = vperm.xlu0 %950, %v198
        %v952 = vpop.permute.xlu0 %951
        %954 = vset.pattern.permute.xlu0 24
        %955 = vperm.xlu0 %954, %v199
        %v956 = vpop.permute.xlu0 %955
        %958 = vset.pattern.permute.xlu0 24
        %959 = vperm.xlu0 %958, %v200
        %v960 = vpop.permute.xlu0 %959
        %962 = vset.pattern.permute.xlu0 24
        %963 = vperm.xlu0 %962, %v201
        %v964 = vpop.permute.xlu0 %963
        %966 = vset.pattern.permute.xlu0 24
        %967 = vperm.xlu0 %966, %v202
        %v968 = vpop.permute.xlu0 %967
        %970 = vset.pattern.permute.xlu0 24
        %971 = vperm.xlu0 %970, %v203
        %v972 = vpop.permute.xlu0 %971
        %974 = vset.pattern.permute.xlu0 24
        %975 = vperm.xlu0 %974, %v204
        %v976 = vpop.permute.xlu0 %975
        %v978 = vmul.f32 %v948, %v245
        %v979 = vmul.f32 %v952, %v245
        %v980 = vmul.f32 %v956, %v245
        %v981 = vmul.f32 %v960, %v245
        %v982 = vmul.f32 %v964, %v245
        %v983 = vmul.f32 %v968, %v245
        %v984 = vmul.f32 %v972, %v245
        %v985 = vmul.f32 %v976, %v245
        %986 = vset.pattern.permute.xlu0 25
        %987 = vperm.xlu0 %986, %v197
        %v988 = vpop.permute.xlu0 %987
        %990 = vset.pattern.permute.xlu0 25
        %991 = vperm.xlu0 %990, %v198
        %v992 = vpop.permute.xlu0 %991
        %994 = vset.pattern.permute.xlu0 25
        %995 = vperm.xlu0 %994, %v199
        %v996 = vpop.permute.xlu0 %995
        %998 = vset.pattern.permute.xlu0 25
        %999 = vperm.xlu0 %998, %v200
        %v1000 = vpop.permute.xlu0 %999
        %1002 = vset.pattern.permute.xlu0 25
        %1003 = vperm.xlu0 %1002, %v201
        %v1004 = vpop.permute.xlu0 %1003
        %1006 = vset.pattern.permute.xlu0 25
        %1007 = vperm.xlu0 %1006, %v202
        %v1008 = vpop.permute.xlu0 %1007
        %1010 = vset.pattern.permute.xlu0 25
        %1011 = vperm.xlu0 %1010, %v203
        %v1012 = vpop.permute.xlu0 %1011
        %1014 = vset.pattern.permute.xlu0 25
        %1015 = vperm.xlu0 %1014, %v204
        %v1016 = vpop.permute.xlu0 %1015
        %v1018 = vmul.f32 %v988, %v286
        %v1019 = vmul.f32 %v992, %v286
        %v1020 = vmul.f32 %v996, %v286
        %v1021 = vmul.f32 %v1000, %v286
        %v1022 = vmul.f32 %v1004, %v286
        %v1023 = vmul.f32 %v1008, %v286
        %v1024 = vmul.f32 %v1012, %v286
        %v1025 = vmul.f32 %v1016, %v286
        %v1026 = vadd.f32 %v978, %v1018
        %v1027 = vadd.f32 %v979, %v1019
        %v1028 = vadd.f32 %v980, %v1020
        %v1029 = vadd.f32 %v981, %v1021
        %v1030 = vadd.f32 %v982, %v1022
        %v1031 = vadd.f32 %v983, %v1023
        %v1032 = vadd.f32 %v984, %v1024
        %v1033 = vadd.f32 %v985, %v1025
        %1034 = vset.pattern.permute.xlu0 26
        %1035 = vperm.xlu0 %1034, %v197
        %v1036 = vpop.permute.xlu0 %1035
        %1038 = vset.pattern.permute.xlu0 26
        %1039 = vperm.xlu0 %1038, %v198
        %v1040 = vpop.permute.xlu0 %1039
        %1042 = vset.pattern.permute.xlu0 26
        %1043 = vperm.xlu0 %1042, %v199
        %v1044 = vpop.permute.xlu0 %1043
        %1046 = vset.pattern.permute.xlu0 26
        %1047 = vperm.xlu0 %1046, %v200
        %v1048 = vpop.permute.xlu0 %1047
        %1050 = vset.pattern.permute.xlu0 26
        %1051 = vperm.xlu0 %1050, %v201
        %v1052 = vpop.permute.xlu0 %1051
        %1054 = vset.pattern.permute.xlu0 26
        %1055 = vperm.xlu0 %1054, %v202
        %v1056 = vpop.permute.xlu0 %1055
        %1058 = vset.pattern.permute.xlu0 26
        %1059 = vperm.xlu0 %1058, %v203
        %v1060 = vpop.permute.xlu0 %1059
        %1062 = vset.pattern.permute.xlu0 26
        %1063 = vperm.xlu0 %1062, %v204
        %v1064 = vpop.permute.xlu0 %1063
        %v1066 = vmul.f32 %v1036, %v335
        %v1067 = vmul.f32 %v1040, %v335
        %v1068 = vmul.f32 %v1044, %v335
        %v1069 = vmul.f32 %v1048, %v335
        %v1070 = vmul.f32 %v1052, %v335
        %v1071 = vmul.f32 %v1056, %v335
        %v1072 = vmul.f32 %v1060, %v335
        %v1073 = vmul.f32 %v1064, %v335
        %v1074 = vadd.f32 %v1026, %v1066
        %v1075 = vadd.f32 %v1027, %v1067
        %v1076 = vadd.f32 %v1028, %v1068
        %v1077 = vadd.f32 %v1029, %v1069
        %v1078 = vadd.f32 %v1030, %v1070
        %v1079 = vadd.f32 %v1031, %v1071
        %v1080 = vadd.f32 %v1032, %v1072
        %v1081 = vadd.f32 %v1033, %v1073
        %1082 = vset.pattern.permute.xlu0 27
        %1083 = vperm.xlu0 %1082, %v197
        %v1084 = vpop.permute.xlu0 %1083
        %1086 = vset.pattern.permute.xlu0 27
        %1087 = vperm.xlu0 %1086, %v198
        %v1088 = vpop.permute.xlu0 %1087
        %1090 = vset.pattern.permute.xlu0 27
        %1091 = vperm.xlu0 %1090, %v199
        %v1092 = vpop.permute.xlu0 %1091
        %1094 = vset.pattern.permute.xlu0 27
        %1095 = vperm.xlu0 %1094, %v200
        %v1096 = vpop.permute.xlu0 %1095
        %1098 = vset.pattern.permute.xlu0 27
        %1099 = vperm.xlu0 %1098, %v201
        %v1100 = vpop.permute.xlu0 %1099
        %1102 = vset.pattern.permute.xlu0 27
        %1103 = vperm.xlu0 %1102, %v202
        %v1104 = vpop.permute.xlu0 %1103
        %1106 = vset.pattern.permute.xlu0 27
        %1107 = vperm.xlu0 %1106, %v203
        %v1108 = vpop.permute.xlu0 %1107
        %1110 = vset.pattern.permute.xlu0 27
        %1111 = vperm.xlu0 %1110, %v204
        %v1112 = vpop.permute.xlu0 %1111
        %v1114 = vmul.f32 %v1084, %v384
        %v1115 = vmul.f32 %v1088, %v384
        %v1116 = vmul.f32 %v1092, %v384
        %v1117 = vmul.f32 %v1096, %v384
        %v1118 = vmul.f32 %v1100, %v384
        %v1119 = vmul.f32 %v1104, %v384
        %v1120 = vmul.f32 %v1108, %v384
        %v1121 = vmul.f32 %v1112, %v384
        %v1122 = vadd.f32 %v1074, %v1114
        %v1123 = vadd.f32 %v1075, %v1115
        %v1124 = vadd.f32 %v1076, %v1116
        %v1125 = vadd.f32 %v1077, %v1117
        %v1126 = vadd.f32 %v1078, %v1118
        %v1127 = vadd.f32 %v1079, %v1119
        %v1128 = vadd.f32 %v1080, %v1120
        %v1129 = vadd.f32 %v1081, %v1121
        %1130 = vset.pattern.permute.xlu0 28
        %1131 = vperm.xlu0 %1130, %v197
        %v1132 = vpop.permute.xlu0 %1131
        %1134 = vset.pattern.permute.xlu0 28
        %1135 = vperm.xlu0 %1134, %v198
        %v1136 = vpop.permute.xlu0 %1135
        %1138 = vset.pattern.permute.xlu0 28
        %1139 = vperm.xlu0 %1138, %v199
        %v1140 = vpop.permute.xlu0 %1139
        %1142 = vset.pattern.permute.xlu0 28
        %1143 = vperm.xlu0 %1142, %v200
        %v1144 = vpop.permute.xlu0 %1143
        %1146 = vset.pattern.permute.xlu0 28
        %1147 = vperm.xlu0 %1146, %v201
        %v1148 = vpop.permute.xlu0 %1147
        %1150 = vset.pattern.permute.xlu0 28
        %1151 = vperm.xlu0 %1150, %v202
        %v1152 = vpop.permute.xlu0 %1151
        %1154 = vset.pattern.permute.xlu0 28
        %1155 = vperm.xlu0 %1154, %v203
        %v1156 = vpop.permute.xlu0 %1155
        %1158 = vset.pattern.permute.xlu0 28
        %1159 = vperm.xlu0 %1158, %v204
        %v1160 = vpop.permute.xlu0 %1159
        %v1162 = vmul.f32 %v1132, %v433
        %v1163 = vmul.f32 %v1136, %v433
        %v1164 = vmul.f32 %v1140, %v433
        %v1165 = vmul.f32 %v1144, %v433
        %v1166 = vmul.f32 %v1148, %v433
        %v1167 = vmul.f32 %v1152, %v433
        %v1168 = vmul.f32 %v1156, %v433
        %v1169 = vmul.f32 %v1160, %v433
        %v1170 = vadd.f32 %v1122, %v1162
        %v1171 = vadd.f32 %v1123, %v1163
        %v1172 = vadd.f32 %v1124, %v1164
        %v1173 = vadd.f32 %v1125, %v1165
        %v1174 = vadd.f32 %v1126, %v1166
        %v1175 = vadd.f32 %v1127, %v1167
        %v1176 = vadd.f32 %v1128, %v1168
        %v1177 = vadd.f32 %v1129, %v1169
        %v1178 = vmax.f32 %v930, %v1170
        %v1179 = vmax.f32 %v931, %v1171
        %v1180 = vmax.f32 %v932, %v1172
        %v1181 = vmax.f32 %v933, %v1173
        %v1182 = vmax.f32 %v934, %v1174
        %v1183 = vmax.f32 %v935, %v1175
        %v1184 = vmax.f32 %v936, %v1176
        %v1185 = vmax.f32 %v937, %v1177
        %v1186 = vadd.f32 %v938, %v1170
        %v1187 = vadd.f32 %v939, %v1171
        %v1188 = vadd.f32 %v940, %v1172
        %v1189 = vadd.f32 %v941, %v1173
        %v1190 = vadd.f32 %v942, %v1174
        %v1191 = vadd.f32 %v943, %v1175
        %v1192 = vadd.f32 %v944, %v1176
        %v1193 = vadd.f32 %v945, %v1177
        %1194 = vset.pattern.permute.xlu0 32
        %1195 = vperm.xlu0 %1194, %v197
        %v1196 = vpop.permute.xlu0 %1195
        %1198 = vset.pattern.permute.xlu0 32
        %1199 = vperm.xlu0 %1198, %v198
        %v1200 = vpop.permute.xlu0 %1199
        %1202 = vset.pattern.permute.xlu0 32
        %1203 = vperm.xlu0 %1202, %v199
        %v1204 = vpop.permute.xlu0 %1203
        %1206 = vset.pattern.permute.xlu0 32
        %1207 = vperm.xlu0 %1206, %v200
        %v1208 = vpop.permute.xlu0 %1207
        %1210 = vset.pattern.permute.xlu0 32
        %1211 = vperm.xlu0 %1210, %v201
        %v1212 = vpop.permute.xlu0 %1211
        %1214 = vset.pattern.permute.xlu0 32
        %1215 = vperm.xlu0 %1214, %v202
        %v1216 = vpop.permute.xlu0 %1215
        %1218 = vset.pattern.permute.xlu0 32
        %1219 = vperm.xlu0 %1218, %v203
        %v1220 = vpop.permute.xlu0 %1219
        %1222 = vset.pattern.permute.xlu0 32
        %1223 = vperm.xlu0 %1222, %v204
        %v1224 = vpop.permute.xlu0 %1223
        %v1226 = vmul.f32 %v1196, %v245
        %v1227 = vmul.f32 %v1200, %v245
        %v1228 = vmul.f32 %v1204, %v245
        %v1229 = vmul.f32 %v1208, %v245
        %v1230 = vmul.f32 %v1212, %v245
        %v1231 = vmul.f32 %v1216, %v245
        %v1232 = vmul.f32 %v1220, %v245
        %v1233 = vmul.f32 %v1224, %v245
        %1234 = vset.pattern.permute.xlu0 33
        %1235 = vperm.xlu0 %1234, %v197
        %v1236 = vpop.permute.xlu0 %1235
        %1238 = vset.pattern.permute.xlu0 33
        %1239 = vperm.xlu0 %1238, %v198
        %v1240 = vpop.permute.xlu0 %1239
        %1242 = vset.pattern.permute.xlu0 33
        %1243 = vperm.xlu0 %1242, %v199
        %v1244 = vpop.permute.xlu0 %1243
        %1246 = vset.pattern.permute.xlu0 33
        %1247 = vperm.xlu0 %1246, %v200
        %v1248 = vpop.permute.xlu0 %1247
        %1250 = vset.pattern.permute.xlu0 33
        %1251 = vperm.xlu0 %1250, %v201
        %v1252 = vpop.permute.xlu0 %1251
        %1254 = vset.pattern.permute.xlu0 33
        %1255 = vperm.xlu0 %1254, %v202
        %v1256 = vpop.permute.xlu0 %1255
        %1258 = vset.pattern.permute.xlu0 33
        %1259 = vperm.xlu0 %1258, %v203
        %v1260 = vpop.permute.xlu0 %1259
        %1262 = vset.pattern.permute.xlu0 33
        %1263 = vperm.xlu0 %1262, %v204
        %v1264 = vpop.permute.xlu0 %1263
        %v1266 = vmul.f32 %v1236, %v286
        %v1267 = vmul.f32 %v1240, %v286
        %v1268 = vmul.f32 %v1244, %v286
        %v1269 = vmul.f32 %v1248, %v286
        %v1270 = vmul.f32 %v1252, %v286
        %v1271 = vmul.f32 %v1256, %v286
        %v1272 = vmul.f32 %v1260, %v286
        %v1273 = vmul.f32 %v1264, %v286
        %v1274 = vadd.f32 %v1226, %v1266
        %v1275 = vadd.f32 %v1227, %v1267
        %v1276 = vadd.f32 %v1228, %v1268
        %v1277 = vadd.f32 %v1229, %v1269
        %v1278 = vadd.f32 %v1230, %v1270
        %v1279 = vadd.f32 %v1231, %v1271
        %v1280 = vadd.f32 %v1232, %v1272
        %v1281 = vadd.f32 %v1233, %v1273
        %1282 = vset.pattern.permute.xlu0 34
        %1283 = vperm.xlu0 %1282, %v197
        %v1284 = vpop.permute.xlu0 %1283
        %1286 = vset.pattern.permute.xlu0 34
        %1287 = vperm.xlu0 %1286, %v198
        %v1288 = vpop.permute.xlu0 %1287
        %1290 = vset.pattern.permute.xlu0 34
        %1291 = vperm.xlu0 %1290, %v199
        %v1292 = vpop.permute.xlu0 %1291
        %1294 = vset.pattern.permute.xlu0 34
        %1295 = vperm.xlu0 %1294, %v200
        %v1296 = vpop.permute.xlu0 %1295
        %1298 = vset.pattern.permute.xlu0 34
        %1299 = vperm.xlu0 %1298, %v201
        %v1300 = vpop.permute.xlu0 %1299
        %1302 = vset.pattern.permute.xlu0 34
        %1303 = vperm.xlu0 %1302, %v202
        %v1304 = vpop.permute.xlu0 %1303
        %1306 = vset.pattern.permute.xlu0 34
        %1307 = vperm.xlu0 %1306, %v203
        %v1308 = vpop.permute.xlu0 %1307
        %1310 = vset.pattern.permute.xlu0 34
        %1311 = vperm.xlu0 %1310, %v204
        %v1312 = vpop.permute.xlu0 %1311
        %v1314 = vmul.f32 %v1284, %v335
        %v1315 = vmul.f32 %v1288, %v335
        %v1316 = vmul.f32 %v1292, %v335
        %v1317 = vmul.f32 %v1296, %v335
        %v1318 = vmul.f32 %v1300, %v335
        %v1319 = vmul.f32 %v1304, %v335
        %v1320 = vmul.f32 %v1308, %v335
        %v1321 = vmul.f32 %v1312, %v335
        %v1322 = vadd.f32 %v1274, %v1314
        %v1323 = vadd.f32 %v1275, %v1315
        %v1324 = vadd.f32 %v1276, %v1316
        %v1325 = vadd.f32 %v1277, %v1317
        %v1326 = vadd.f32 %v1278, %v1318
        %v1327 = vadd.f32 %v1279, %v1319
        %v1328 = vadd.f32 %v1280, %v1320
        %v1329 = vadd.f32 %v1281, %v1321
        %1330 = vset.pattern.permute.xlu0 35
        %1331 = vperm.xlu0 %1330, %v197
        %v1332 = vpop.permute.xlu0 %1331
        %1334 = vset.pattern.permute.xlu0 35
        %1335 = vperm.xlu0 %1334, %v198
        %v1336 = vpop.permute.xlu0 %1335
        %1338 = vset.pattern.permute.xlu0 35
        %1339 = vperm.xlu0 %1338, %v199
        %v1340 = vpop.permute.xlu0 %1339
        %1342 = vset.pattern.permute.xlu0 35
        %1343 = vperm.xlu0 %1342, %v200
        %v1344 = vpop.permute.xlu0 %1343
        %1346 = vset.pattern.permute.xlu0 35
        %1347 = vperm.xlu0 %1346, %v201
        %v1348 = vpop.permute.xlu0 %1347
        %1350 = vset.pattern.permute.xlu0 35
        %1351 = vperm.xlu0 %1350, %v202
        %v1352 = vpop.permute.xlu0 %1351
        %1354 = vset.pattern.permute.xlu0 35
        %1355 = vperm.xlu0 %1354, %v203
        %v1356 = vpop.permute.xlu0 %1355
        %1358 = vset.pattern.permute.xlu0 35
        %1359 = vperm.xlu0 %1358, %v204
        %v1360 = vpop.permute.xlu0 %1359
        %v1362 = vmul.f32 %v1332, %v384
        %v1363 = vmul.f32 %v1336, %v384
        %v1364 = vmul.f32 %v1340, %v384
        %v1365 = vmul.f32 %v1344, %v384
        %v1366 = vmul.f32 %v1348, %v384
        %v1367 = vmul.f32 %v1352, %v384
        %v1368 = vmul.f32 %v1356, %v384
        %v1369 = vmul.f32 %v1360, %v384
        %v1370 = vadd.f32 %v1322, %v1362
        %v1371 = vadd.f32 %v1323, %v1363
        %v1372 = vadd.f32 %v1324, %v1364
        %v1373 = vadd.f32 %v1325, %v1365
        %v1374 = vadd.f32 %v1326, %v1366
        %v1375 = vadd.f32 %v1327, %v1367
        %v1376 = vadd.f32 %v1328, %v1368
        %v1377 = vadd.f32 %v1329, %v1369
        %1378 = vset.pattern.permute.xlu0 36
        %1379 = vperm.xlu0 %1378, %v197
        %v1380 = vpop.permute.xlu0 %1379
        %1382 = vset.pattern.permute.xlu0 36
        %1383 = vperm.xlu0 %1382, %v198
        %v1384 = vpop.permute.xlu0 %1383
        %1386 = vset.pattern.permute.xlu0 36
        %1387 = vperm.xlu0 %1386, %v199
        %v1388 = vpop.permute.xlu0 %1387
        %1390 = vset.pattern.permute.xlu0 36
        %1391 = vperm.xlu0 %1390, %v200
        %v1392 = vpop.permute.xlu0 %1391
        %1394 = vset.pattern.permute.xlu0 36
        %1395 = vperm.xlu0 %1394, %v201
        %v1396 = vpop.permute.xlu0 %1395
        %1398 = vset.pattern.permute.xlu0 36
        %1399 = vperm.xlu0 %1398, %v202
        %v1400 = vpop.permute.xlu0 %1399
        %1402 = vset.pattern.permute.xlu0 36
        %1403 = vperm.xlu0 %1402, %v203
        %v1404 = vpop.permute.xlu0 %1403
        %1406 = vset.pattern.permute.xlu0 36
        %1407 = vperm.xlu0 %1406, %v204
        %v1408 = vpop.permute.xlu0 %1407
        %v1410 = vmul.f32 %v1380, %v433
        %v1411 = vmul.f32 %v1384, %v433
        %v1412 = vmul.f32 %v1388, %v433
        %v1413 = vmul.f32 %v1392, %v433
        %v1414 = vmul.f32 %v1396, %v433
        %v1415 = vmul.f32 %v1400, %v433
        %v1416 = vmul.f32 %v1404, %v433
        %v1417 = vmul.f32 %v1408, %v433
        %v1418 = vadd.f32 %v1370, %v1410
        %v1419 = vadd.f32 %v1371, %v1411
        %v1420 = vadd.f32 %v1372, %v1412
        %v1421 = vadd.f32 %v1373, %v1413
        %v1422 = vadd.f32 %v1374, %v1414
        %v1423 = vadd.f32 %v1375, %v1415
        %v1424 = vadd.f32 %v1376, %v1416
        %v1425 = vadd.f32 %v1377, %v1417
        %v1426 = vmax.f32 %v1178, %v1418
        %v1427 = vmax.f32 %v1179, %v1419
        %v1428 = vmax.f32 %v1180, %v1420
        %v1429 = vmax.f32 %v1181, %v1421
        %v1430 = vmax.f32 %v1182, %v1422
        %v1431 = vmax.f32 %v1183, %v1423
        %v1432 = vmax.f32 %v1184, %v1424
        %v1433 = vmax.f32 %v1185, %v1425
        %v1434 = vadd.f32 %v1186, %v1418
        %v1435 = vadd.f32 %v1187, %v1419
        %v1436 = vadd.f32 %v1188, %v1420
        %v1437 = vadd.f32 %v1189, %v1421
        %v1438 = vadd.f32 %v1190, %v1422
        %v1439 = vadd.f32 %v1191, %v1423
        %v1440 = vadd.f32 %v1192, %v1424
        %v1441 = vadd.f32 %v1193, %v1425
        %1442 = vset.pattern.permute.xlu0 40
        %1443 = vperm.xlu0 %1442, %v197
        %v1444 = vpop.permute.xlu0 %1443
        %1446 = vset.pattern.permute.xlu0 40
        %1447 = vperm.xlu0 %1446, %v198
        %v1448 = vpop.permute.xlu0 %1447
        %1450 = vset.pattern.permute.xlu0 40
        %1451 = vperm.xlu0 %1450, %v199
        %v1452 = vpop.permute.xlu0 %1451
        %1454 = vset.pattern.permute.xlu0 40
        %1455 = vperm.xlu0 %1454, %v200
        %v1456 = vpop.permute.xlu0 %1455
        %1458 = vset.pattern.permute.xlu0 40
        %1459 = vperm.xlu0 %1458, %v201
        %v1460 = vpop.permute.xlu0 %1459
        %1462 = vset.pattern.permute.xlu0 40
        %1463 = vperm.xlu0 %1462, %v202
        %v1464 = vpop.permute.xlu0 %1463
        %1466 = vset.pattern.permute.xlu0 40
        %1467 = vperm.xlu0 %1466, %v203
        %v1468 = vpop.permute.xlu0 %1467
        %1470 = vset.pattern.permute.xlu0 40
        %1471 = vperm.xlu0 %1470, %v204
        %v1472 = vpop.permute.xlu0 %1471
        %v1474 = vmul.f32 %v1444, %v245
        %v1475 = vmul.f32 %v1448, %v245
        %v1476 = vmul.f32 %v1452, %v245
        %v1477 = vmul.f32 %v1456, %v245
        %v1478 = vmul.f32 %v1460, %v245
        %v1479 = vmul.f32 %v1464, %v245
        %v1480 = vmul.f32 %v1468, %v245
        %v1481 = vmul.f32 %v1472, %v245
        %1482 = vset.pattern.permute.xlu0 41
        %1483 = vperm.xlu0 %1482, %v197
        %v1484 = vpop.permute.xlu0 %1483
        %1486 = vset.pattern.permute.xlu0 41
        %1487 = vperm.xlu0 %1486, %v198
        %v1488 = vpop.permute.xlu0 %1487
        %1490 = vset.pattern.permute.xlu0 41
        %1491 = vperm.xlu0 %1490, %v199
        %v1492 = vpop.permute.xlu0 %1491
        %1494 = vset.pattern.permute.xlu0 41
        %1495 = vperm.xlu0 %1494, %v200
        %v1496 = vpop.permute.xlu0 %1495
        %1498 = vset.pattern.permute.xlu0 41
        %1499 = vperm.xlu0 %1498, %v201
        %v1500 = vpop.permute.xlu0 %1499
        %1502 = vset.pattern.permute.xlu0 41
        %1503 = vperm.xlu0 %1502, %v202
        %v1504 = vpop.permute.xlu0 %1503
        %1506 = vset.pattern.permute.xlu0 41
        %1507 = vperm.xlu0 %1506, %v203
        %v1508 = vpop.permute.xlu0 %1507
        %1510 = vset.pattern.permute.xlu0 41
        %1511 = vperm.xlu0 %1510, %v204
        %v1512 = vpop.permute.xlu0 %1511
        %v1514 = vmul.f32 %v1484, %v286
        %v1515 = vmul.f32 %v1488, %v286
        %v1516 = vmul.f32 %v1492, %v286
        %v1517 = vmul.f32 %v1496, %v286
        %v1518 = vmul.f32 %v1500, %v286
        %v1519 = vmul.f32 %v1504, %v286
        %v1520 = vmul.f32 %v1508, %v286
        %v1521 = vmul.f32 %v1512, %v286
        %v1522 = vadd.f32 %v1474, %v1514
        %v1523 = vadd.f32 %v1475, %v1515
        %v1524 = vadd.f32 %v1476, %v1516
        %v1525 = vadd.f32 %v1477, %v1517
        %v1526 = vadd.f32 %v1478, %v1518
        %v1527 = vadd.f32 %v1479, %v1519
        %v1528 = vadd.f32 %v1480, %v1520
        %v1529 = vadd.f32 %v1481, %v1521
        %1530 = vset.pattern.permute.xlu0 42
        %1531 = vperm.xlu0 %1530, %v197
        %v1532 = vpop.permute.xlu0 %1531
        %1534 = vset.pattern.permute.xlu0 42
        %1535 = vperm.xlu0 %1534, %v198
        %v1536 = vpop.permute.xlu0 %1535
        %1538 = vset.pattern.permute.xlu0 42
        %1539 = vperm.xlu0 %1538, %v199
        %v1540 = vpop.permute.xlu0 %1539
        %1542 = vset.pattern.permute.xlu0 42
        %1543 = vperm.xlu0 %1542, %v200
        %v1544 = vpop.permute.xlu0 %1543
        %1546 = vset.pattern.permute.xlu0 42
        %1547 = vperm.xlu0 %1546, %v201
        %v1548 = vpop.permute.xlu0 %1547
        %1550 = vset.pattern.permute.xlu0 42
        %1551 = vperm.xlu0 %1550, %v202
        %v1552 = vpop.permute.xlu0 %1551
        %1554 = vset.pattern.permute.xlu0 42
        %1555 = vperm.xlu0 %1554, %v203
        %v1556 = vpop.permute.xlu0 %1555
        %1558 = vset.pattern.permute.xlu0 42
        %1559 = vperm.xlu0 %1558, %v204
        %v1560 = vpop.permute.xlu0 %1559
        %v1562 = vmul.f32 %v1532, %v335
        %v1563 = vmul.f32 %v1536, %v335
        %v1564 = vmul.f32 %v1540, %v335
        %v1565 = vmul.f32 %v1544, %v335
        %v1566 = vmul.f32 %v1548, %v335
        %v1567 = vmul.f32 %v1552, %v335
        %v1568 = vmul.f32 %v1556, %v335
        %v1569 = vmul.f32 %v1560, %v335
        %v1570 = vadd.f32 %v1522, %v1562
        %v1571 = vadd.f32 %v1523, %v1563
        %v1572 = vadd.f32 %v1524, %v1564
        %v1573 = vadd.f32 %v1525, %v1565
        %v1574 = vadd.f32 %v1526, %v1566
        %v1575 = vadd.f32 %v1527, %v1567
        %v1576 = vadd.f32 %v1528, %v1568
        %v1577 = vadd.f32 %v1529, %v1569
        %1578 = vset.pattern.permute.xlu0 43
        %1579 = vperm.xlu0 %1578, %v197
        %v1580 = vpop.permute.xlu0 %1579
        %1582 = vset.pattern.permute.xlu0 43
        %1583 = vperm.xlu0 %1582, %v198
        %v1584 = vpop.permute.xlu0 %1583
        %1586 = vset.pattern.permute.xlu0 43
        %1587 = vperm.xlu0 %1586, %v199
        %v1588 = vpop.permute.xlu0 %1587
        %1590 = vset.pattern.permute.xlu0 43
        %1591 = vperm.xlu0 %1590, %v200
        %v1592 = vpop.permute.xlu0 %1591
        %1594 = vset.pattern.permute.xlu0 43
        %1595 = vperm.xlu0 %1594, %v201
        %v1596 = vpop.permute.xlu0 %1595
        %1598 = vset.pattern.permute.xlu0 43
        %1599 = vperm.xlu0 %1598, %v202
        %v1600 = vpop.permute.xlu0 %1599
        %1602 = vset.pattern.permute.xlu0 43
        %1603 = vperm.xlu0 %1602, %v203
        %v1604 = vpop.permute.xlu0 %1603
        %1606 = vset.pattern.permute.xlu0 43
        %1607 = vperm.xlu0 %1606, %v204
        %v1608 = vpop.permute.xlu0 %1607
        %v1610 = vmul.f32 %v1580, %v384
        %v1611 = vmul.f32 %v1584, %v384
        %v1612 = vmul.f32 %v1588, %v384
        %v1613 = vmul.f32 %v1592, %v384
        %v1614 = vmul.f32 %v1596, %v384
        %v1615 = vmul.f32 %v1600, %v384
        %v1616 = vmul.f32 %v1604, %v384
        %v1617 = vmul.f32 %v1608, %v384
        %v1618 = vadd.f32 %v1570, %v1610
        %v1619 = vadd.f32 %v1571, %v1611
        %v1620 = vadd.f32 %v1572, %v1612
        %v1621 = vadd.f32 %v1573, %v1613
        %v1622 = vadd.f32 %v1574, %v1614
        %v1623 = vadd.f32 %v1575, %v1615
        %v1624 = vadd.f32 %v1576, %v1616
        %v1625 = vadd.f32 %v1577, %v1617
        %1626 = vset.pattern.permute.xlu0 44
        %1627 = vperm.xlu0 %1626, %v197
        %v1628 = vpop.permute.xlu0 %1627
        %1630 = vset.pattern.permute.xlu0 44
        %1631 = vperm.xlu0 %1630, %v198
        %v1632 = vpop.permute.xlu0 %1631
        %1634 = vset.pattern.permute.xlu0 44
        %1635 = vperm.xlu0 %1634, %v199
        %v1636 = vpop.permute.xlu0 %1635
        %1638 = vset.pattern.permute.xlu0 44
        %1639 = vperm.xlu0 %1638, %v200
        %v1640 = vpop.permute.xlu0 %1639
        %1642 = vset.pattern.permute.xlu0 44
        %1643 = vperm.xlu0 %1642, %v201
        %v1644 = vpop.permute.xlu0 %1643
        %1646 = vset.pattern.permute.xlu0 44
        %1647 = vperm.xlu0 %1646, %v202
        %v1648 = vpop.permute.xlu0 %1647
        %1650 = vset.pattern.permute.xlu0 44
        %1651 = vperm.xlu0 %1650, %v203
        %v1652 = vpop.permute.xlu0 %1651
        %1654 = vset.pattern.permute.xlu0 44
        %1655 = vperm.xlu0 %1654, %v204
        %v1656 = vpop.permute.xlu0 %1655
        %v1658 = vmul.f32 %v1628, %v433
        %v1659 = vmul.f32 %v1632, %v433
        %v1660 = vmul.f32 %v1636, %v433
        %v1661 = vmul.f32 %v1640, %v433
        %v1662 = vmul.f32 %v1644, %v433
        %v1663 = vmul.f32 %v1648, %v433
        %v1664 = vmul.f32 %v1652, %v433
        %v1665 = vmul.f32 %v1656, %v433
        %v1666 = vadd.f32 %v1618, %v1658
        %v1667 = vadd.f32 %v1619, %v1659
        %v1668 = vadd.f32 %v1620, %v1660
        %v1669 = vadd.f32 %v1621, %v1661
        %v1670 = vadd.f32 %v1622, %v1662
        %v1671 = vadd.f32 %v1623, %v1663
        %v1672 = vadd.f32 %v1624, %v1664
        %v1673 = vadd.f32 %v1625, %v1665
        %v1674 = vmax.f32 %v1426, %v1666
        %v1675 = vmax.f32 %v1427, %v1667
        %v1676 = vmax.f32 %v1428, %v1668
        %v1677 = vmax.f32 %v1429, %v1669
        %v1678 = vmax.f32 %v1430, %v1670
        %v1679 = vmax.f32 %v1431, %v1671
        %v1680 = vmax.f32 %v1432, %v1672
        %v1681 = vmax.f32 %v1433, %v1673
        %v1682 = vadd.f32 %v1434, %v1666
        %v1683 = vadd.f32 %v1435, %v1667
        %v1684 = vadd.f32 %v1436, %v1668
        %v1685 = vadd.f32 %v1437, %v1669
        %v1686 = vadd.f32 %v1438, %v1670
        %v1687 = vadd.f32 %v1439, %v1671
        %v1688 = vadd.f32 %v1440, %v1672
        %v1689 = vadd.f32 %v1441, %v1673
        %1690 = vset.pattern.permute.xlu0 48
        %1691 = vperm.xlu0 %1690, %v197
        %v1692 = vpop.permute.xlu0 %1691
        %1694 = vset.pattern.permute.xlu0 48
        %1695 = vperm.xlu0 %1694, %v198
        %v1696 = vpop.permute.xlu0 %1695
        %1698 = vset.pattern.permute.xlu0 48
        %1699 = vperm.xlu0 %1698, %v199
        %v1700 = vpop.permute.xlu0 %1699
        %1702 = vset.pattern.permute.xlu0 48
        %1703 = vperm.xlu0 %1702, %v200
        %v1704 = vpop.permute.xlu0 %1703
        %1706 = vset.pattern.permute.xlu0 48
        %1707 = vperm.xlu0 %1706, %v201
        %v1708 = vpop.permute.xlu0 %1707
        %1710 = vset.pattern.permute.xlu0 48
        %1711 = vperm.xlu0 %1710, %v202
        %v1712 = vpop.permute.xlu0 %1711
        %1714 = vset.pattern.permute.xlu0 48
        %1715 = vperm.xlu0 %1714, %v203
        %v1716 = vpop.permute.xlu0 %1715
        %1718 = vset.pattern.permute.xlu0 48
        %1719 = vperm.xlu0 %1718, %v204
        %v1720 = vpop.permute.xlu0 %1719
        %v1722 = vmul.f32 %v1692, %v245
        %v1723 = vmul.f32 %v1696, %v245
        %v1724 = vmul.f32 %v1700, %v245
        %v1725 = vmul.f32 %v1704, %v245
        %v1726 = vmul.f32 %v1708, %v245
        %v1727 = vmul.f32 %v1712, %v245
        %v1728 = vmul.f32 %v1716, %v245
        %v1729 = vmul.f32 %v1720, %v245
        %1730 = vset.pattern.permute.xlu0 49
        %1731 = vperm.xlu0 %1730, %v197
        %v1732 = vpop.permute.xlu0 %1731
        %1734 = vset.pattern.permute.xlu0 49
        %1735 = vperm.xlu0 %1734, %v198
        %v1736 = vpop.permute.xlu0 %1735
        %1738 = vset.pattern.permute.xlu0 49
        %1739 = vperm.xlu0 %1738, %v199
        %v1740 = vpop.permute.xlu0 %1739
        %1742 = vset.pattern.permute.xlu0 49
        %1743 = vperm.xlu0 %1742, %v200
        %v1744 = vpop.permute.xlu0 %1743
        %1746 = vset.pattern.permute.xlu0 49
        %1747 = vperm.xlu0 %1746, %v201
        %v1748 = vpop.permute.xlu0 %1747
        %1750 = vset.pattern.permute.xlu0 49
        %1751 = vperm.xlu0 %1750, %v202
        %v1752 = vpop.permute.xlu0 %1751
        %1754 = vset.pattern.permute.xlu0 49
        %1755 = vperm.xlu0 %1754, %v203
        %v1756 = vpop.permute.xlu0 %1755
        %1758 = vset.pattern.permute.xlu0 49
        %1759 = vperm.xlu0 %1758, %v204
        %v1760 = vpop.permute.xlu0 %1759
        %v1762 = vmul.f32 %v1732, %v286
        %v1763 = vmul.f32 %v1736, %v286
        %v1764 = vmul.f32 %v1740, %v286
        %v1765 = vmul.f32 %v1744, %v286
        %v1766 = vmul.f32 %v1748, %v286
        %v1767 = vmul.f32 %v1752, %v286
        %v1768 = vmul.f32 %v1756, %v286
        %v1769 = vmul.f32 %v1760, %v286
        %v1770 = vadd.f32 %v1722, %v1762
        %v1771 = vadd.f32 %v1723, %v1763
        %v1772 = vadd.f32 %v1724, %v1764
        %v1773 = vadd.f32 %v1725, %v1765
        %v1774 = vadd.f32 %v1726, %v1766
        %v1775 = vadd.f32 %v1727, %v1767
        %v1776 = vadd.f32 %v1728, %v1768
        %v1777 = vadd.f32 %v1729, %v1769
        %1778 = vset.pattern.permute.xlu0 50
        %1779 = vperm.xlu0 %1778, %v197
        %v1780 = vpop.permute.xlu0 %1779
        %1782 = vset.pattern.permute.xlu0 50
        %1783 = vperm.xlu0 %1782, %v198
        %v1784 = vpop.permute.xlu0 %1783
        %1786 = vset.pattern.permute.xlu0 50
        %1787 = vperm.xlu0 %1786, %v199
        %v1788 = vpop.permute.xlu0 %1787
        %1790 = vset.pattern.permute.xlu0 50
        %1791 = vperm.xlu0 %1790, %v200
        %v1792 = vpop.permute.xlu0 %1791
        %1794 = vset.pattern.permute.xlu0 50
        %1795 = vperm.xlu0 %1794, %v201
        %v1796 = vpop.permute.xlu0 %1795
        %1798 = vset.pattern.permute.xlu0 50
        %1799 = vperm.xlu0 %1798, %v202
        %v1800 = vpop.permute.xlu0 %1799
        %1802 = vset.pattern.permute.xlu0 50
        %1803 = vperm.xlu0 %1802, %v203
        %v1804 = vpop.permute.xlu0 %1803
        %1806 = vset.pattern.permute.xlu0 50
        %1807 = vperm.xlu0 %1806, %v204
        %v1808 = vpop.permute.xlu0 %1807
        %v1810 = vmul.f32 %v1780, %v335
        %v1811 = vmul.f32 %v1784, %v335
        %v1812 = vmul.f32 %v1788, %v335
        %v1813 = vmul.f32 %v1792, %v335
        %v1814 = vmul.f32 %v1796, %v335
        %v1815 = vmul.f32 %v1800, %v335
        %v1816 = vmul.f32 %v1804, %v335
        %v1817 = vmul.f32 %v1808, %v335
        %v1818 = vadd.f32 %v1770, %v1810
        %v1819 = vadd.f32 %v1771, %v1811
        %v1820 = vadd.f32 %v1772, %v1812
        %v1821 = vadd.f32 %v1773, %v1813
        %v1822 = vadd.f32 %v1774, %v1814
        %v1823 = vadd.f32 %v1775, %v1815
        %v1824 = vadd.f32 %v1776, %v1816
        %v1825 = vadd.f32 %v1777, %v1817
        %1826 = vset.pattern.permute.xlu0 51
        %1827 = vperm.xlu0 %1826, %v197
        %v1828 = vpop.permute.xlu0 %1827
        %1830 = vset.pattern.permute.xlu0 51
        %1831 = vperm.xlu0 %1830, %v198
        %v1832 = vpop.permute.xlu0 %1831
        %1834 = vset.pattern.permute.xlu0 51
        %1835 = vperm.xlu0 %1834, %v199
        %v1836 = vpop.permute.xlu0 %1835
        %1838 = vset.pattern.permute.xlu0 51
        %1839 = vperm.xlu0 %1838, %v200
        %v1840 = vpop.permute.xlu0 %1839
        %1842 = vset.pattern.permute.xlu0 51
        %1843 = vperm.xlu0 %1842, %v201
        %v1844 = vpop.permute.xlu0 %1843
        %1846 = vset.pattern.permute.xlu0 51
        %1847 = vperm.xlu0 %1846, %v202
        %v1848 = vpop.permute.xlu0 %1847
        %1850 = vset.pattern.permute.xlu0 51
        %1851 = vperm.xlu0 %1850, %v203
        %v1852 = vpop.permute.xlu0 %1851
        %1854 = vset.pattern.permute.xlu0 51
        %1855 = vperm.xlu0 %1854, %v204
        %v1856 = vpop.permute.xlu0 %1855
        %v1858 = vmul.f32 %v1828, %v384
        %v1859 = vmul.f32 %v1832, %v384
        %v1860 = vmul.f32 %v1836, %v384
        %v1861 = vmul.f32 %v1840, %v384
        %v1862 = vmul.f32 %v1844, %v384
        %v1863 = vmul.f32 %v1848, %v384
        %v1864 = vmul.f32 %v1852, %v384
        %v1865 = vmul.f32 %v1856, %v384
        %v1866 = vadd.f32 %v1818, %v1858
        %v1867 = vadd.f32 %v1819, %v1859
        %v1868 = vadd.f32 %v1820, %v1860
        %v1869 = vadd.f32 %v1821, %v1861
        %v1870 = vadd.f32 %v1822, %v1862
        %v1871 = vadd.f32 %v1823, %v1863
        %v1872 = vadd.f32 %v1824, %v1864
        %v1873 = vadd.f32 %v1825, %v1865
        %1874 = vset.pattern.permute.xlu0 52
        %1875 = vperm.xlu0 %1874, %v197
        %v1876 = vpop.permute.xlu0 %1875
        %1878 = vset.pattern.permute.xlu0 52
        %1879 = vperm.xlu0 %1878, %v198
        %v1880 = vpop.permute.xlu0 %1879
        %1882 = vset.pattern.permute.xlu0 52
        %1883 = vperm.xlu0 %1882, %v199
        %v1884 = vpop.permute.xlu0 %1883
        %1886 = vset.pattern.permute.xlu0 52
        %1887 = vperm.xlu0 %1886, %v200
        %v1888 = vpop.permute.xlu0 %1887
        %1890 = vset.pattern.permute.xlu0 52
        %1891 = vperm.xlu0 %1890, %v201
        %v1892 = vpop.permute.xlu0 %1891
        %1894 = vset.pattern.permute.xlu0 52
        %1895 = vperm.xlu0 %1894, %v202
        %v1896 = vpop.permute.xlu0 %1895
        %1898 = vset.pattern.permute.xlu0 52
        %1899 = vperm.xlu0 %1898, %v203
        %v1900 = vpop.permute.xlu0 %1899
        %1902 = vset.pattern.permute.xlu0 52
        %1903 = vperm.xlu0 %1902, %v204
        %v1904 = vpop.permute.xlu0 %1903
        %v1906 = vmul.f32 %v1876, %v433
        %v1907 = vmul.f32 %v1880, %v433
        %v1908 = vmul.f32 %v1884, %v433
        %v1909 = vmul.f32 %v1888, %v433
        %v1910 = vmul.f32 %v1892, %v433
        %v1911 = vmul.f32 %v1896, %v433
        %v1912 = vmul.f32 %v1900, %v433
        %v1913 = vmul.f32 %v1904, %v433
        %v1914 = vadd.f32 %v1866, %v1906
        %v1915 = vadd.f32 %v1867, %v1907
        %v1916 = vadd.f32 %v1868, %v1908
        %v1917 = vadd.f32 %v1869, %v1909
        %v1918 = vadd.f32 %v1870, %v1910
        %v1919 = vadd.f32 %v1871, %v1911
        %v1920 = vadd.f32 %v1872, %v1912
        %v1921 = vadd.f32 %v1873, %v1913
        %v1922 = vmax.f32 %v1674, %v1914
        %v1923 = vmax.f32 %v1675, %v1915
        %v1924 = vmax.f32 %v1676, %v1916
        %v1925 = vmax.f32 %v1677, %v1917
        %v1926 = vmax.f32 %v1678, %v1918
        %v1927 = vmax.f32 %v1679, %v1919
        %v1928 = vmax.f32 %v1680, %v1920
        %v1929 = vmax.f32 %v1681, %v1921
        %v1930 = vadd.f32 %v1682, %v1914
        %v1931 = vadd.f32 %v1683, %v1915
        %v1932 = vadd.f32 %v1684, %v1916
        %v1933 = vadd.f32 %v1685, %v1917
        %v1934 = vadd.f32 %v1686, %v1918
        %v1935 = vadd.f32 %v1687, %v1919
        %v1936 = vadd.f32 %v1688, %v1920
        %v1937 = vadd.f32 %v1689, %v1921
        %1938 = vset.pattern.permute.xlu0 56
        %1939 = vperm.xlu0 %1938, %v197
        %v1940 = vpop.permute.xlu0 %1939
        %1942 = vset.pattern.permute.xlu0 56
        %1943 = vperm.xlu0 %1942, %v198
        %v1944 = vpop.permute.xlu0 %1943
        %1946 = vset.pattern.permute.xlu0 56
        %1947 = vperm.xlu0 %1946, %v199
        %v1948 = vpop.permute.xlu0 %1947
        %1950 = vset.pattern.permute.xlu0 56
        %1951 = vperm.xlu0 %1950, %v200
        %v1952 = vpop.permute.xlu0 %1951
        %1954 = vset.pattern.permute.xlu0 56
        %1955 = vperm.xlu0 %1954, %v201
        %v1956 = vpop.permute.xlu0 %1955
        %1958 = vset.pattern.permute.xlu0 56
        %1959 = vperm.xlu0 %1958, %v202
        %v1960 = vpop.permute.xlu0 %1959
        %1962 = vset.pattern.permute.xlu0 56
        %1963 = vperm.xlu0 %1962, %v203
        %v1964 = vpop.permute.xlu0 %1963
        %1966 = vset.pattern.permute.xlu0 56
        %1967 = vperm.xlu0 %1966, %v204
        %v1968 = vpop.permute.xlu0 %1967
        %v1970 = vmul.f32 %v1940, %v245
        %v1971 = vmul.f32 %v1944, %v245
        %v1972 = vmul.f32 %v1948, %v245
        %v1973 = vmul.f32 %v1952, %v245
        %v1974 = vmul.f32 %v1956, %v245
        %v1975 = vmul.f32 %v1960, %v245
        %v1976 = vmul.f32 %v1964, %v245
        %v1977 = vmul.f32 %v1968, %v245
        %1978 = vset.pattern.permute.xlu0 57
        %1979 = vperm.xlu0 %1978, %v197
        %v1980 = vpop.permute.xlu0 %1979
        %1982 = vset.pattern.permute.xlu0 57
        %1983 = vperm.xlu0 %1982, %v198
        %v1984 = vpop.permute.xlu0 %1983
        %1986 = vset.pattern.permute.xlu0 57
        %1987 = vperm.xlu0 %1986, %v199
        %v1988 = vpop.permute.xlu0 %1987
        %1990 = vset.pattern.permute.xlu0 57
        %1991 = vperm.xlu0 %1990, %v200
        %v1992 = vpop.permute.xlu0 %1991
        %1994 = vset.pattern.permute.xlu0 57
        %1995 = vperm.xlu0 %1994, %v201
        %v1996 = vpop.permute.xlu0 %1995
        %1998 = vset.pattern.permute.xlu0 57
        %1999 = vperm.xlu0 %1998, %v202
        %v2000 = vpop.permute.xlu0 %1999
        %2002 = vset.pattern.permute.xlu0 57
        %2003 = vperm.xlu0 %2002, %v203
        %v2004 = vpop.permute.xlu0 %2003
        %2006 = vset.pattern.permute.xlu0 57
        %2007 = vperm.xlu0 %2006, %v204
        %v2008 = vpop.permute.xlu0 %2007
        %v2010 = vmul.f32 %v1980, %v286
        %v2011 = vmul.f32 %v1984, %v286
        %v2012 = vmul.f32 %v1988, %v286
        %v2013 = vmul.f32 %v1992, %v286
        %v2014 = vmul.f32 %v1996, %v286
        %v2015 = vmul.f32 %v2000, %v286
        %v2016 = vmul.f32 %v2004, %v286
        %v2017 = vmul.f32 %v2008, %v286
        %v2018 = vadd.f32 %v1970, %v2010
        %v2019 = vadd.f32 %v1971, %v2011
        %v2020 = vadd.f32 %v1972, %v2012
        %v2021 = vadd.f32 %v1973, %v2013
        %v2022 = vadd.f32 %v1974, %v2014
        %v2023 = vadd.f32 %v1975, %v2015
        %v2024 = vadd.f32 %v1976, %v2016
        %v2025 = vadd.f32 %v1977, %v2017
        %2026 = vset.pattern.permute.xlu0 58
        %2027 = vperm.xlu0 %2026, %v197
        %v2028 = vpop.permute.xlu0 %2027
        %2030 = vset.pattern.permute.xlu0 58
        %2031 = vperm.xlu0 %2030, %v198
        %v2032 = vpop.permute.xlu0 %2031
        %2034 = vset.pattern.permute.xlu0 58
        %2035 = vperm.xlu0 %2034, %v199
        %v2036 = vpop.permute.xlu0 %2035
        %2038 = vset.pattern.permute.xlu0 58
        %2039 = vperm.xlu0 %2038, %v200
        %v2040 = vpop.permute.xlu0 %2039
        %2042 = vset.pattern.permute.xlu0 58
        %2043 = vperm.xlu0 %2042, %v201
        %v2044 = vpop.permute.xlu0 %2043
        %2046 = vset.pattern.permute.xlu0 58
        %2047 = vperm.xlu0 %2046, %v202
        %v2048 = vpop.permute.xlu0 %2047
        %2050 = vset.pattern.permute.xlu0 58
        %2051 = vperm.xlu0 %2050, %v203
        %v2052 = vpop.permute.xlu0 %2051
        %2054 = vset.pattern.permute.xlu0 58
        %2055 = vperm.xlu0 %2054, %v204
        %v2056 = vpop.permute.xlu0 %2055
        %v2058 = vmul.f32 %v2028, %v335
        %v2059 = vmul.f32 %v2032, %v335
        %v2060 = vmul.f32 %v2036, %v335
        %v2061 = vmul.f32 %v2040, %v335
        %v2062 = vmul.f32 %v2044, %v335
        %v2063 = vmul.f32 %v2048, %v335
        %v2064 = vmul.f32 %v2052, %v335
        %v2065 = vmul.f32 %v2056, %v335
        %v2066 = vadd.f32 %v2018, %v2058
        %v2067 = vadd.f32 %v2019, %v2059
        %v2068 = vadd.f32 %v2020, %v2060
        %v2069 = vadd.f32 %v2021, %v2061
        %v2070 = vadd.f32 %v2022, %v2062
        %v2071 = vadd.f32 %v2023, %v2063
        %v2072 = vadd.f32 %v2024, %v2064
        %v2073 = vadd.f32 %v2025, %v2065
        %2074 = vset.pattern.permute.xlu0 59
        %2075 = vperm.xlu0 %2074, %v197
        %v2076 = vpop.permute.xlu0 %2075
        %2078 = vset.pattern.permute.xlu0 59
        %2079 = vperm.xlu0 %2078, %v198
        %v2080 = vpop.permute.xlu0 %2079
        %2082 = vset.pattern.permute.xlu0 59
        %2083 = vperm.xlu0 %2082, %v199
        %v2084 = vpop.permute.xlu0 %2083
        %2086 = vset.pattern.permute.xlu0 59
        %2087 = vperm.xlu0 %2086, %v200
        %v2088 = vpop.permute.xlu0 %2087
        %2090 = vset.pattern.permute.xlu0 59
        %2091 = vperm.xlu0 %2090, %v201
        %v2092 = vpop.permute.xlu0 %2091
        %2094 = vset.pattern.permute.xlu0 59
        %2095 = vperm.xlu0 %2094, %v202
        %v2096 = vpop.permute.xlu0 %2095
        %2098 = vset.pattern.permute.xlu0 59
        %2099 = vperm.xlu0 %2098, %v203
        %v2100 = vpop.permute.xlu0 %2099
        %2102 = vset.pattern.permute.xlu0 59
        %2103 = vperm.xlu0 %2102, %v204
        %v2104 = vpop.permute.xlu0 %2103
        %v2106 = vmul.f32 %v2076, %v384
        %v2107 = vmul.f32 %v2080, %v384
        %v2108 = vmul.f32 %v2084, %v384
        %v2109 = vmul.f32 %v2088, %v384
        %v2110 = vmul.f32 %v2092, %v384
        %v2111 = vmul.f32 %v2096, %v384
        %v2112 = vmul.f32 %v2100, %v384
        %v2113 = vmul.f32 %v2104, %v384
        %v2114 = vadd.f32 %v2066, %v2106
        %v2115 = vadd.f32 %v2067, %v2107
        %v2116 = vadd.f32 %v2068, %v2108
        %v2117 = vadd.f32 %v2069, %v2109
        %v2118 = vadd.f32 %v2070, %v2110
        %v2119 = vadd.f32 %v2071, %v2111
        %v2120 = vadd.f32 %v2072, %v2112
        %v2121 = vadd.f32 %v2073, %v2113
        %2122 = vset.pattern.permute.xlu0 60
        %2123 = vperm.xlu0 %2122, %v197
        %v2124 = vpop.permute.xlu0 %2123
        %2126 = vset.pattern.permute.xlu0 60
        %2127 = vperm.xlu0 %2126, %v198
        %v2128 = vpop.permute.xlu0 %2127
        %2130 = vset.pattern.permute.xlu0 60
        %2131 = vperm.xlu0 %2130, %v199
        %v2132 = vpop.permute.xlu0 %2131
        %2134 = vset.pattern.permute.xlu0 60
        %2135 = vperm.xlu0 %2134, %v200
        %v2136 = vpop.permute.xlu0 %2135
        %2138 = vset.pattern.permute.xlu0 60
        %2139 = vperm.xlu0 %2138, %v201
        %v2140 = vpop.permute.xlu0 %2139
        %2142 = vset.pattern.permute.xlu0 60
        %2143 = vperm.xlu0 %2142, %v202
        %v2144 = vpop.permute.xlu0 %2143
        %2146 = vset.pattern.permute.xlu0 60
        %2147 = vperm.xlu0 %2146, %v203
        %v2148 = vpop.permute.xlu0 %2147
        %2150 = vset.pattern.permute.xlu0 60
        %2151 = vperm.xlu0 %2150, %v204
        %v2152 = vpop.permute.xlu0 %2151
        %v2154 = vmul.f32 %v2124, %v433
        %v2155 = vmul.f32 %v2128, %v433
        %v2156 = vmul.f32 %v2132, %v433
        %v2157 = vmul.f32 %v2136, %v433
        %v2158 = vmul.f32 %v2140, %v433
        %v2159 = vmul.f32 %v2144, %v433
        %v2160 = vmul.f32 %v2148, %v433
        %v2161 = vmul.f32 %v2152, %v433
        %v2162 = vadd.f32 %v2114, %v2154
        %v2163 = vadd.f32 %v2115, %v2155
        %v2164 = vadd.f32 %v2116, %v2156
        %v2165 = vadd.f32 %v2117, %v2157
        %v2166 = vadd.f32 %v2118, %v2158
        %v2167 = vadd.f32 %v2119, %v2159
        %v2168 = vadd.f32 %v2120, %v2160
        %v2169 = vadd.f32 %v2121, %v2161
        %v2170 = vmax.f32 %v1922, %v2162
        %v2171 = vmax.f32 %v1923, %v2163
        %v2172 = vmax.f32 %v1924, %v2164
        %v2173 = vmax.f32 %v1925, %v2165
        %v2174 = vmax.f32 %v1926, %v2166
        %v2175 = vmax.f32 %v1927, %v2167
        %v2176 = vmax.f32 %v1928, %v2168
        %v2177 = vmax.f32 %v1929, %v2169
        %v2178 = vadd.f32 %v1930, %v2162
        %v2179 = vadd.f32 %v1931, %v2163
        %v2180 = vadd.f32 %v1932, %v2164
        %v2181 = vadd.f32 %v1933, %v2165
        %v2182 = vadd.f32 %v1934, %v2166
        %v2183 = vadd.f32 %v1935, %v2167
        %v2184 = vadd.f32 %v1936, %v2168
        %v2185 = vadd.f32 %v1937, %v2169
        %v2186 = vld [vmem:[%s191] sm:$0xff]
        %v2187 = vld [vmem:[%s191 + $0x8] sm:$0xff]
        %v2188 = vld [vmem:[%s191 + $0x10] sm:$0xff]
        %v2189 = vld [vmem:[%s191 + $0x18] sm:$0xff]
        %2191 = vset.pattern.permute.xlu0 0
        %2192 = vperm.xlu0 %2191, %v2186
        %v2193 = vpop.permute.xlu0 %2192
        %2196 = vset.pattern.permute.xlu0 0
        %2197 = vperm.xlu0 %2196, %v2187
        %v2198 = vpop.permute.xlu0 %2197
        %2201 = vset.pattern.permute.xlu0 0
        %2202 = vperm.xlu0 %2201, %v2188
        %v2203 = vpop.permute.xlu0 %2202
        %2206 = vset.pattern.permute.xlu0 0
        %2207 = vperm.xlu0 %2206, %v2189
        %v2208 = vpop.permute.xlu0 %2207
        %v2210 = vperm.slane %v195, 0
        %v2211 = vmul.f32 %v2193, %v2210
        %v2212 = vmul.f32 %v2198, %v2210
        %v2213 = vmul.f32 %v2203, %v2210
        %v2214 = vmul.f32 %v2208, %v2210
        %v2215 = vperm.slane %v196, 0
        %v2216 = vadd.f32 %v2215, %v2211
        %v2217 = vadd.f32 %v2215, %v2212
        %v2218 = vadd.f32 %v2215, %v2213
        %v2219 = vadd.f32 %v2215, %v2214
        %2220 = vset.pattern.permute.xlu0 8
        %2221 = vperm.xlu0 %2220, %v2186
        %v2222 = vpop.permute.xlu0 %2221
        %2224 = vset.pattern.permute.xlu0 8
        %2225 = vperm.xlu0 %2224, %v2187
        %v2226 = vpop.permute.xlu0 %2225
        %2228 = vset.pattern.permute.xlu0 8
        %2229 = vperm.xlu0 %2228, %v2188
        %v2230 = vpop.permute.xlu0 %2229
        %2232 = vset.pattern.permute.xlu0 8
        %2233 = vperm.xlu0 %2232, %v2189
        %v2234 = vpop.permute.xlu0 %2233
        %v2236 = vperm.slane %v195, 4
        %v2237 = vmul.f32 %v2222, %v2236
        %v2238 = vmul.f32 %v2226, %v2236
        %v2239 = vmul.f32 %v2230, %v2236
        %v2240 = vmul.f32 %v2234, %v2236
        %v2241 = vadd.f32 %v2216, %v2237
        %v2242 = vadd.f32 %v2217, %v2238
        %v2243 = vadd.f32 %v2218, %v2239
        %v2244 = vadd.f32 %v2219, %v2240
        %2245 = vset.pattern.permute.xlu0 1
        %2246 = vperm.xlu0 %2245, %v2186
        %v2247 = vpop.permute.xlu0 %2246
        %2249 = vset.pattern.permute.xlu0 1
        %2250 = vperm.xlu0 %2249, %v2187
        %v2251 = vpop.permute.xlu0 %2250
        %2253 = vset.pattern.permute.xlu0 1
        %2254 = vperm.xlu0 %2253, %v2188
        %v2255 = vpop.permute.xlu0 %2254
        %2257 = vset.pattern.permute.xlu0 1
        %2258 = vperm.xlu0 %2257, %v2189
        %v2259 = vpop.permute.xlu0 %2258
        %v2261 = vperm.slane %v195, 1
        %v2262 = vmul.f32 %v2247, %v2261
        %v2263 = vmul.f32 %v2251, %v2261
        %v2264 = vmul.f32 %v2255, %v2261
        %v2265 = vmul.f32 %v2259, %v2261
        %v2266 = vadd.f32 %v2241, %v2262
        %v2267 = vadd.f32 %v2242, %v2263
        %v2268 = vadd.f32 %v2243, %v2264
        %v2269 = vadd.f32 %v2244, %v2265
        %2270 = vset.pattern.permute.xlu0 9
        %2271 = vperm.xlu0 %2270, %v2186
        %v2272 = vpop.permute.xlu0 %2271
        %2274 = vset.pattern.permute.xlu0 9
        %2275 = vperm.xlu0 %2274, %v2187
        %v2276 = vpop.permute.xlu0 %2275
        %2278 = vset.pattern.permute.xlu0 9
        %2279 = vperm.xlu0 %2278, %v2188
        %v2280 = vpop.permute.xlu0 %2279
        %2282 = vset.pattern.permute.xlu0 9
        %2283 = vperm.xlu0 %2282, %v2189
        %v2284 = vpop.permute.xlu0 %2283
        %v2286 = vperm.slane %v195, 5
        %v2287 = vmul.f32 %v2272, %v2286
        %v2288 = vmul.f32 %v2276, %v2286
        %v2289 = vmul.f32 %v2280, %v2286
        %v2290 = vmul.f32 %v2284, %v2286
        %v2291 = vadd.f32 %v2266, %v2287
        %v2292 = vadd.f32 %v2267, %v2288
        %v2293 = vadd.f32 %v2268, %v2289
        %v2294 = vadd.f32 %v2269, %v2290
        %2295 = vset.pattern.permute.xlu0 2
        %2296 = vperm.xlu0 %2295, %v2186
        %v2297 = vpop.permute.xlu0 %2296
        %2299 = vset.pattern.permute.xlu0 2
        %2300 = vperm.xlu0 %2299, %v2187
        %v2301 = vpop.permute.xlu0 %2300
        %2303 = vset.pattern.permute.xlu0 2
        %2304 = vperm.xlu0 %2303, %v2188
        %v2305 = vpop.permute.xlu0 %2304
        %2307 = vset.pattern.permute.xlu0 2
        %2308 = vperm.xlu0 %2307, %v2189
        %v2309 = vpop.permute.xlu0 %2308
        %v2311 = vperm.slane %v195, 2
        %v2312 = vmul.f32 %v2297, %v2311
        %v2313 = vmul.f32 %v2301, %v2311
        %v2314 = vmul.f32 %v2305, %v2311
        %v2315 = vmul.f32 %v2309, %v2311
        %v2316 = vadd.f32 %v2291, %v2312
        %v2317 = vadd.f32 %v2292, %v2313
        %v2318 = vadd.f32 %v2293, %v2314
        %v2319 = vadd.f32 %v2294, %v2315
        %2320 = vset.pattern.permute.xlu0 10
        %2321 = vperm.xlu0 %2320, %v2186
        %v2322 = vpop.permute.xlu0 %2321
        %2324 = vset.pattern.permute.xlu0 10
        %2325 = vperm.xlu0 %2324, %v2187
        %v2326 = vpop.permute.xlu0 %2325
        %2328 = vset.pattern.permute.xlu0 10
        %2329 = vperm.xlu0 %2328, %v2188
        %v2330 = vpop.permute.xlu0 %2329
        %2332 = vset.pattern.permute.xlu0 10
        %2333 = vperm.xlu0 %2332, %v2189
        %v2334 = vpop.permute.xlu0 %2333
        %v2336 = vperm.slane %v195, 6
        %v2337 = vmul.f32 %v2322, %v2336
        %v2338 = vmul.f32 %v2326, %v2336
        %v2339 = vmul.f32 %v2330, %v2336
        %v2340 = vmul.f32 %v2334, %v2336
        %v2341 = vadd.f32 %v2316, %v2337
        %v2342 = vadd.f32 %v2317, %v2338
        %v2343 = vadd.f32 %v2318, %v2339
        %v2344 = vadd.f32 %v2319, %v2340
        %2345 = vset.pattern.permute.xlu0 3
        %2346 = vperm.xlu0 %2345, %v2186
        %v2347 = vpop.permute.xlu0 %2346
        %2349 = vset.pattern.permute.xlu0 3
        %2350 = vperm.xlu0 %2349, %v2187
        %v2351 = vpop.permute.xlu0 %2350
        %2353 = vset.pattern.permute.xlu0 3
        %2354 = vperm.xlu0 %2353, %v2188
        %v2355 = vpop.permute.xlu0 %2354
        %2357 = vset.pattern.permute.xlu0 3
        %2358 = vperm.xlu0 %2357, %v2189
        %v2359 = vpop.permute.xlu0 %2358
        %v2361 = vperm.slane %v195, 3
        %v2362 = vmul.f32 %v2347, %v2361
        %v2363 = vmul.f32 %v2351, %v2361
        %v2364 = vmul.f32 %v2355, %v2361
        %v2365 = vmul.f32 %v2359, %v2361
        %v2366 = vadd.f32 %v2341, %v2362
        %v2367 = vadd.f32 %v2342, %v2363
        %v2368 = vadd.f32 %v2343, %v2364
        %v2369 = vadd.f32 %v2344, %v2365
        %2370 = vset.pattern.permute.xlu0 11
        %2371 = vperm.xlu0 %2370, %v2186
        %v2372 = vpop.permute.xlu0 %2371
        %2374 = vset.pattern.permute.xlu0 11
        %2375 = vperm.xlu0 %2374, %v2187
        %v2376 = vpop.permute.xlu0 %2375
        %2378 = vset.pattern.permute.xlu0 11
        %2379 = vperm.xlu0 %2378, %v2188
        %v2380 = vpop.permute.xlu0 %2379
        %2382 = vset.pattern.permute.xlu0 11
        %2383 = vperm.xlu0 %2382, %v2189
        %v2384 = vpop.permute.xlu0 %2383
        %v2386 = vperm.slane %v195, 7
        %v2387 = vmul.f32 %v2372, %v2386
        %v2388 = vmul.f32 %v2376, %v2386
        %v2389 = vmul.f32 %v2380, %v2386
        %v2390 = vmul.f32 %v2384, %v2386
        %v2391 = vadd.f32 %v2366, %v2387
        %v2392 = vadd.f32 %v2367, %v2388
        %v2393 = vadd.f32 %v2368, %v2389
        %v2394 = vadd.f32 %v2369, %v2390
        %v2395 = vmax.f32 %v2186, 1.0
        %v2396 = vmax.f32 %v2187, 1.0
        %v2397 = vmax.f32 %v2188, 1.0
        %v2398 = vmax.f32 %v2189, 1.0
        %v2399 = vrcp.pop %v2395
        %v2400 = vmul.f32 %v2395, %v2399
        %v2401 = vsub.f32 1.0, %v2400
        %v2402 = vmul.f32 %v2399, %v2401
        %v2403 = vadd.f32 %v2399, %v2402
        %vm2404 = vweird.f32 %v2395
        %vm2405 = vweird.f32 %v2399
        %vm2406 = vmor %vm2404, %vm2405
        %v2407 = vsel %vm2406, %v2399, %v2403
        %v2408 = vand.u32 2147483647, %v2395
        %vm2409 = vcmp.eq.f32.partialorder %v2408, 8.507059e+37
        %v2410 = vand.u32 %v2395, 2147483648
        %v2411 = vor.u32 1.1754944e-38, %v2410
        %v2412 = vsel %vm2409, %v2411, %v2407
        %v2413 = vmul.f32 1.0, %v2412
        %v2414 = vrcp.pop %v2396
        %v2415 = vmul.f32 %v2396, %v2414
        %v2416 = vsub.f32 1.0, %v2415
        %v2417 = vmul.f32 %v2414, %v2416
        %v2418 = vadd.f32 %v2414, %v2417
        %vm2419 = vweird.f32 %v2396
        %vm2420 = vweird.f32 %v2414
        %vm2421 = vmor %vm2419, %vm2420
        %v2422 = vsel %vm2421, %v2414, %v2418
        %v2423 = vand.u32 2147483647, %v2396
        %vm2424 = vcmp.eq.f32.partialorder %v2423, 8.507059e+37
        %v2425 = vand.u32 %v2396, 2147483648
        %v2426 = vor.u32 1.1754944e-38, %v2425
        %v2427 = vsel %vm2424, %v2426, %v2422
        %v2428 = vmul.f32 1.0, %v2427
        %v2429 = vrcp.pop %v2397
        %v2430 = vmul.f32 %v2397, %v2429
        %v2431 = vsub.f32 1.0, %v2430
        %v2432 = vmul.f32 %v2429, %v2431
        %v2433 = vadd.f32 %v2429, %v2432
        %vm2434 = vweird.f32 %v2397
        %vm2435 = vweird.f32 %v2429
        %vm2436 = vmor %vm2434, %vm2435
        %v2437 = vsel %vm2436, %v2429, %v2433
        %v2438 = vand.u32 2147483647, %v2397
        %vm2439 = vcmp.eq.f32.partialorder %v2438, 8.507059e+37
        %v2440 = vand.u32 %v2397, 2147483648
        %v2441 = vor.u32 1.1754944e-38, %v2440
        %v2442 = vsel %vm2439, %v2441, %v2437
        %v2443 = vmul.f32 1.0, %v2442
        %v2444 = vrcp.pop %v2398
        %v2445 = vmul.f32 %v2398, %v2444
        %v2446 = vsub.f32 1.0, %v2445
        %v2447 = vmul.f32 %v2444, %v2446
        %v2448 = vadd.f32 %v2444, %v2447
        %vm2449 = vweird.f32 %v2398
        %vm2450 = vweird.f32 %v2444
        %vm2451 = vmor %vm2449, %vm2450
        %v2452 = vsel %vm2451, %v2444, %v2448
        %v2453 = vand.u32 2147483647, %v2398
        %vm2454 = vcmp.eq.f32.partialorder %v2453, 8.507059e+37
        %v2455 = vand.u32 %v2398, 2147483648
        %v2456 = vor.u32 1.1754944e-38, %v2455
        %v2457 = vsel %vm2454, %v2456, %v2452
        %v2458 = vmul.f32 1.0, %v2457
        %2459 = vrot.lane.b32.xlu0 %v2178, 64
        %v2460 = vpop.permute.xlu0 %2459
        %2461 = vrot.lane.b32.xlu0 %v2179, 64
        %v2462 = vpop.permute.xlu0 %2461
        %2463 = vrot.lane.b32.xlu0 %v2180, 64
        %v2464 = vpop.permute.xlu0 %2463
        %2465 = vrot.lane.b32.xlu0 %v2181, 64
        %v2466 = vpop.permute.xlu0 %2465
        %2468 = vset.pattern.permute.xlu0 4
        %2469 = vperm.xlu0 %2468, %v2413
        %v2470 = vpop.permute.xlu0 %2469
        %2473 = vset.pattern.permute.xlu0 4
        %2474 = vperm.xlu0 %2473, %v2428
        %v2475 = vpop.permute.xlu0 %2474
        %2478 = vset.pattern.permute.xlu0 4
        %2479 = vperm.xlu0 %2478, %v2443
        %v2480 = vpop.permute.xlu0 %2479
        %2483 = vset.pattern.permute.xlu0 4
        %2484 = vperm.xlu0 %2483, %v2458
        %v2485 = vpop.permute.xlu0 %2484
        %v2487 = vmul.f32 %v2460, %v2470
        %v2488 = vmul.f32 %v2462, %v2475
        %v2489 = vmul.f32 %v2464, %v2480
        %v2490 = vmul.f32 %v2466, %v2485
        %v2491 = vsub.f32 %v2170, %v2487
        %v2492 = vsub.f32 %v2171, %v2488
        %v2493 = vsub.f32 %v2172, %v2489
        %v2494 = vsub.f32 %v2173, %v2490
        %2495 = vrot.lane.b32.xlu0 %v2174, 64
        %v2496 = vpop.permute.xlu0 %2495
        %2497 = vrot.lane.b32.xlu0 %v2175, 64
        %v2498 = vpop.permute.xlu0 %2497
        %2499 = vrot.lane.b32.xlu0 %v2176, 64
        %v2500 = vpop.permute.xlu0 %2499
        %2501 = vrot.lane.b32.xlu0 %v2177, 64
        %v2502 = vpop.permute.xlu0 %2501
        %2503 = vset.pattern.permute.xlu0 12
        %2504 = vperm.xlu0 %2503, %v2413
        %v2505 = vpop.permute.xlu0 %2504
        %2507 = vset.pattern.permute.xlu0 12
        %2508 = vperm.xlu0 %2507, %v2428
        %v2509 = vpop.permute.xlu0 %2508
        %2511 = vset.pattern.permute.xlu0 12
        %2512 = vperm.xlu0 %2511, %v2443
        %v2513 = vpop.permute.xlu0 %2512
        %2515 = vset.pattern.permute.xlu0 12
        %2516 = vperm.xlu0 %2515, %v2458
        %v2517 = vpop.permute.xlu0 %2516
        %v2519 = vmul.f32 %v2182, %v2505
        %v2520 = vmul.f32 %v2183, %v2509
        %v2521 = vmul.f32 %v2184, %v2513
        %v2522 = vmul.f32 %v2185, %v2517
        %v2523 = vsub.f32 %v2496, %v2519
        %v2524 = vsub.f32 %v2498, %v2520
        %v2525 = vsub.f32 %v2500, %v2521
        %v2526 = vsub.f32 %v2502, %v2522
        %v2527 = vlaneseq
        %v2528 = vand.u32 %v2527, 127
        %vm2529 = vcmp.lt.s32.totalorder %v2528, 64
        %v2530 = vsel %vm2529, %v2491, %v2523
        %v2531 = vsel %vm2529, %v2492, %v2524
        %v2532 = vsel %vm2529, %v2493, %v2525
        %v2533 = vsel %vm2529, %v2494, %v2526
        %v2534 = vadd.f32 %v2530, %v2391
        %v2535 = vadd.f32 %v2531, %v2392
        %v2536 = vadd.f32 %v2532, %v2393
        %v2537 = vadd.f32 %v2533, %v2394
        %v2538 = vmax.f32 %v2534, 0.0
        %v2539 = vmax.f32 %v2535, 0.0
        %v2540 = vmax.f32 %v2536, 0.0
        %v2541 = vmax.f32 %v2537, 0.0
        %2542 = vst [vmem:[%s180] sm:$0xff] %v2538
        %2543 = vst [vmem:[%s180 + $0x8] sm:$0xff] %v2539
        %2544 = vst [vmem:[%s180 + $0x10] sm:$0xff] %v2540
        %2545 = vst [vmem:[%s180 + $0x18] sm:$0xff] %v2541
        %s2546 = sand.u32 %s98, 1
        %s2547 = scalar_lea.sflag [#allocation3], %s2546
        %s2548 = sand.u32 %s98, 1
        %s2549 = smul.addr %s2548, 32
        %s2550 = scalar_lea.vmem [#allocation2], %s2549
        // Predicated region
        $region33: #{tpu_custom_call.1} parent=31 // pred_check
          %p2551 = pneg %p108
        $region34: #{tpu_custom_call.1} parent=31 // pred_check_branch
          %2553 = sbr.rel (%p2551) target = $region36
        $region35: #{tpu_custom_call.1} parent=31 // pred_region
          %s2554 = smul.u32 4, %s17
          %2556 = vsyncadd %s2547, 0
          %s2557 = smul.addr %s2554, 8
          %s2558 = scalar_lea.hbm %s3, %s2557
          %s2559 = sshll.u32 %s2550, 4
          %s2560 = int_to_ptr.vmem [resolvable:$true] %s2559
          %s2561 = sshll.u32 %s2558, 4
          %s2562 = int_to_ptr.hbm [resolvable:$true] %s2561
          %2567 = dma.vmem_to_hbm [thread:$0]  %s2560, 512, %s2562, %s2547, 128, 128, 8
        $region36: #{tpu_custom_call.1} parent=31 // pred_fallthru
          _
      $region32: #{tpu_custom_call.1} parent=5 // pred_fallthru
        _
      %p2568 = scmp.le.s32.totalorder 2, %s12
      // Predicated region
      $region37: #{tpu_custom_call.1} parent=5 // pred_check
        %p2569 = pneg %p2568
      $region38: #{tpu_custom_call.1} parent=5 // pred_check_branch
        %2571 = sbr.rel (%p2569) target = $region40
      $region39: #{tpu_custom_call.1} parent=5 // pred_region
        %s2572 = ssub.s32 %s12, 2
        // Predicated region
        $region41: #{tpu_custom_call.1} parent=39 // pred_check
          %p2573 = pneg %p114
        $region42: #{tpu_custom_call.1} parent=39 // pred_check_branch
          %2575 = sbr.rel (%p2573) target = $region44
        $region43: #{tpu_custom_call.1} parent=39 // pred_region
          %s2576 = sand.u32 %s99, 1
          %s2577 = scalar_lea.sflag [#allocation3], %s2576
          %s2578 = sand.u32 %s99, 1
          %s2579 = smul.addr %s2578, 32
          %s2580 = scalar_lea.vmem [#allocation2], %s2579
          %2582 = dma.done %s2577, 512
        $region44: #{tpu_custom_call.1} parent=39 // pred_fallthru
          _
      $region40: #{tpu_custom_call.1} parent=5 // pred_fallthru
        _
    $region6: #{tpu_custom_call.1} parent=1 // loop_footer
      %s16 = sadd.s32 1, %s12
    $region7: #{tpu_custom_call.1} parent=1 // loop_footer_branch
      %11 = sbr.rel target = $region3
    $region8: #{tpu_custom_call.1} parent=1 // loop_exit
      _
    %2583 = vsyncpa [#allocation3], 1
    %s2584 = scalar_lea.sflag [#allocation3], 1
    %2585 = vsyncpa %s2584, 1

</llo_original>
